<compile_context>
chip_gen: v5e
topology: v5e:2x2
jax: 0.10.0
libtpu: 0.0.40
codegen_flags: <defaults>
</compile_context>

<pallas_src>
import functools

import jax
import jax.numpy as jnp
from jax.experimental import pallas as pl
from jax.experimental.pallas import tpu as pltpu


# ----------------------------- helpers ------------------------------------ #
def _round_up(x, m):
    return ((x + m - 1) // m) * m


def _pick_tiles(n):
    """Tile sizes (tm rows of W / output, tk reduction cols).  tm | tk always
    so n_pad = round_up(n, tk) is divisible by both.  Larger tiles -> fewer
    ~0.35us grid steps and agg re-read traffic ~ dp/tm of the W traffic."""
    if n >= 8192:
        return 1024, 2048
    if n >= 4096:
        return 512, 1024
    if n >= 2048:
        return 512, 512
    if n >= 1024:
        return 256, 512
    if n >= 512:
        return 256, 256
    return 128, 128


# ----------------------------- Pallas kernel ------------------------------ #
def _hop_kernel(cols_ref, nvalid_ref, w_ref, agg_ref, pooled_in_ref,
                agg_out_ref, pooled_out_ref, acc_sc):
    """One CA graph-convolution hop; k axis compacted to nonzero W blocks.

    cols_ref       : SMEM [ni*max_k] int32  compacted block-column ids per row tile
    nvalid_ref     : SMEM [ni]       int32  #valid entries per row tile
    w_ref          : VMEM [tm, tk]   bf16   W tile (only nonzero blocks DMA'd)
    agg_ref        : VMEM [tk, dp]   bf16   current hop embedding tile
    pooled_in_ref  : VMEM [tm, dp]   f32    running hop-sum (read at last k step)
    agg_out_ref    : VMEM [tm, dp]   bf16   new hop embedding (W @ agg)
    pooled_out_ref : VMEM [tm, dp]   f32    updated running hop-sum (aliased in/out)
    acc_sc         : VMEM [tm, dp]   f32    accumulator, output-resident over k
    """
    i = pl.program_id(0)
    k = pl.program_id(1)

    @pl.when(k == 0)
    def _():
        acc_sc[...] = jnp.zeros_like(acc_sc)

    # Padded tail entries of the compacted list repeat a valid block id, so
    # their DMA is a same-index no-op re-fetch; skip their MXU work here.
    @pl.when(k < nvalid_ref[i])
    def _():
        acc_sc[...] += jnp.dot(w_ref[...], agg_ref[...],
                               preferred_element_type=jnp.float32)

    @pl.when(k == pl.num_programs(1) - 1)
    def _():
        acc = acc_sc[...]
        agg_out_ref[...] = acc.astype(agg_out_ref.dtype)
        pooled_out_ref[...] = pooled_in_ref[...] + acc


def _make_hop_call(n_pad, dp, tm, tk, max_k):
    ni = n_pad // tm

    # Double-buffered I/O tiles + f32 accumulator; 48 MiB cap keeps the same
    # config safe on v7x (64 MiB physical VMEM, 32 MiB scoped default).
    # TODO(synk): per-generation budget -- raise toward ~96 MiB on v5e/v6e
    # (128 MiB physical) and make agg fully VMEM-resident when N_pad*dp*2 fits.
    buf_bytes = (2 * (tm * tk * 2      # W tile (bf16)
                      + tk * dp * 2    # agg in (bf16)
                      + tm * dp * 4    # pooled in (f32)
                      + tm * dp * 2    # agg out (bf16)
                      + tm * dp * 4)   # pooled out (f32)
                 + tm * dp * 4)        # accumulator scratch
    vmem_limit = int(min(max(2 * buf_bytes, 16 << 20), 48 << 20))

    def w_map(i, k, cols, nvalid):        # nonzero W block (i, cols[i, k])
        return (i, cols[i * max_k + k])

    def agg_map(i, k, cols, nvalid):      # matching agg block row
        return (cols[i * max_k + k], 0)

    def row_map(i, k, cols, nvalid):      # row-tile block, resident over k
        return (i, 0)

    return pl.pallas_call(
        _hop_kernel,
        out_shape=(jax.ShapeDtypeStruct((n_pad, dp), jnp.bfloat16),
                   jax.ShapeDtypeStruct((n_pad, dp), jnp.float32)),
        grid_spec=pltpu.PrefetchScalarGridSpec(
            num_scalar_prefetch=2,
            grid=(ni, max_k),
            in_specs=[
                pl.BlockSpec((tm, tk), w_map),     # W (bf16), DMA only nnz blocks
                pl.BlockSpec((tk, dp), agg_map),   # agg (bf16), compacted blocks
                pl.BlockSpec((tm, dp), row_map),   # pooled in (f32)
            ],
            out_specs=[
                pl.BlockSpec((tm, dp), row_map),   # agg out (bf16)
                pl.BlockSpec((tm, dp), row_map),   # pooled out (f32)
            ],
            scratch_shapes=[pltpu.VMEM((tm, dp), jnp.float32)],
        ),
        # pooled updated in place across hops: input index 4 (= 2 scalar-prefetch
        # operands + W + agg + pooled_in) aliases output 1 (pooled_out).
        input_output_aliases={4: 1},
        compiler_params=pltpu.CompilerParams(
            dimension_semantics=("parallel", "arbitrary"),
            vmem_limit_bytes=vmem_limit),
    )


# ------------------------- propagate + pool + gather ----------------------- #
@functools.partial(jax.jit,
                   static_argnames=("n_hops", "d", "tm", "tk", "max_k"))
def _propagate_pool_gather(block_cols, nvalid, w_bf16, embeds_pad,
                           users, pos_items, neg_items,
                           *, n_hops, d, tm, tk, max_k):
    n_pad, dp = embeds_pad.shape
    hop = _make_hop_call(n_pad, dp, tm, tk, max_k)

    agg = embeds_pad.astype(jnp.bfloat16)   # hop state (bf16 MXU operand)
    pooled = embeds_pad                     # running hop-sum; hop-0 term exact f32
    for _ in range(n_hops):
        agg, pooled = hop(block_cols, nvalid, w_bf16, agg, pooled)

    # Mean over hops + row gathers: only the 3*batch gathered rows are scaled
    # (no extra full N x dp read/write pass).
    scale = 1.0 / float(n_hops + 1)
    user_embs = pooled[users, :d] * scale
    pos_embs = pooled[pos_items, :d] * scale
    neg_embs = pooled[neg_items, :d] * scale
    return user_embs, pos_embs, neg_embs


# ------------------------------ Model glue -------------------------------- #
def cagcn_forward(embeds, edge_index, trend, users, pos_items, neg_items,
                  *, n_users, n_hops):
    n_nodes, d = embeds.shape
    tm, tk = _pick_tiles(n_nodes)
    n_pad = _round_up(n_nodes, max(tm, tk))   # tm | tk, so tm also divides n_pad
    dp = _round_up(max(d, 128), 128)
    ni, nk = n_pad // tm, n_pad // tk

    row, col = edge_index

    # ---- O(E) block-occupancy / compaction tables (no dense-W rescan) ------ #
    # W[col[e], row[e]] += trend[e]  =>  block (col//tm, row//tk) is nonzero.
    br = (col // tm).astype(jnp.int32)
    bc = (row // tk).astype(jnp.int32)
    occ = jnp.zeros((ni, nk), jnp.int32).at[br, bc].add(1) > 0
    nvalid = occ.sum(axis=1).astype(jnp.int32)               # (ni,)
    max_k = max(int(jnp.max(nvalid)), 1)                     # concrete grid extent

    # Ascending nonzero block-column list per row tile, padded with the last
    # valid id (same-index DMA is skipped); compute is guarded by nvalid.
    col_ids = jnp.arange(nk, dtype=jnp.int32)
    keyed = jnp.where(occ, col_ids[None, :], nk)
    compact = jnp.sort(keyed, axis=1)[:, :max_k]
    last_valid = jnp.where(
        nvalid > 0, compact[jnp.arange(ni), jnp.maximum(nvalid - 1, 0)], 0)
    block_cols = jnp.where(compact >= nk, last_valid[:, None],
                           compact).reshape(-1).astype(jnp.int32)
    # TODO(synk): on v7x, order row tiles by nnz-block count so the two
    # TensorCores (axis 0 is "parallel") stay load-balanced after compaction.

    # ---- dense propagation matrix, built directly in bf16 ------------------ #
    # Duplicate edges accumulate in bf16 (well within the bf16 MXU tolerance).
    # TODO(synk): for production-size graphs replace the dense (n_pad, n_pad) W
    # with a CSR/edge-list kernel (DMA gather), and/or 8-bit W tiles with
    # per-block scales (int8 on v5e/v6e, fp8-e4m3 on v7x) once memory-bound.
    w_bf16 = jnp.zeros((n_pad, n_pad), jnp.bfloat16).at[col, row].add(
        trend.astype(jnp.bfloat16))

    # Zero-pad embeddings to (n_pad, dp) for lane-dense (128-wide) tiles.
    embeds_pad = jnp.zeros((n_pad, dp), jnp.float32).at[:n_nodes, :d].set(
        embeds.astype(jnp.float32))

    user_embs, pos_embs, neg_embs = _propagate_pool_gather(
        block_cols, nvalid, w_bf16, embeds_pad, users, pos_items, neg_items,
        n_hops=n_hops, d=d, tm=tm, tk=tk, max_k=max_k)

    # Raw-embedding gathers of the original forward.
    return (user_embs, pos_embs, neg_embs,
            embeds[users], embeds[pos_items], embeds[neg_items])


# --------------------------- Pure-JAX reference ---------------------------- #
def reference_pooled(embeds, edge_index, trend, *, n_nodes, n_hops):
    row, col = edge_index
    agg = embeds.astype(jnp.float32)
    embs = [agg]
    for _ in range(n_hops):
        out = agg[row] * trend[:, None]
        agg = jnp.zeros((n_nodes, embeds.shape[1]), jnp.float32).at[col].add(out)
        embs.append(agg)
    return jnp.stack(embs, axis=1).mean(axis=1)


# --------------------------------- Main ------------------------------------ #
if __name__ == "__main__":
    # args (small, deterministic)
    n_users = 96
    n_items = 160
    n_nodes = n_users + n_items          # 256 -> two 128-row tiles
    embedding_dim = 64                   # padded to 128 lanes inside the wrapper
    n_hops = 3
    n_edges = 512
    batch = 8

    key = jax.random.PRNGKey(0)
    k_emb, k_row, k_col, k_trend, k_u, k_p, k_n = jax.random.split(key, 7)

    # xavier_uniform init for embeds (deterministic, in-script)
    fan_in, fan_out = n_nodes, embedding_dim
    bound = (6.0 / (fan_in + fan_out)) ** 0.5
    embeds = jax.random.uniform(k_emb, (n_nodes, embedding_dim),
                                minval=-bound, maxval=bound, dtype=jnp.float32)

    # synthetic bipartite edges (user <-> item, both directions) with trend
    # weights; the bipartite structure leaves the item-item W block all-zero,
    # exercising both the compacted-DMA path and the padded-tail skip.
    src_u = jax.random.randint(k_row, (n_edges // 2,), 0, n_users)
    dst_i = jax.random.randint(k_col, (n_edges // 2,), n_users, n_nodes)
    row = jnp.concatenate([src_u, dst_i])
    col = jnp.concatenate([dst_i, src_u])
    edge_index = (row.astype(jnp.int32), col.astype(jnp.int32))
    trend = jax.random.uniform(k_trend, (n_edges,), minval=0.05, maxval=1.0,
                               dtype=jnp.float32)

    users = jax.random.randint(k_u, (batch,), 0, n_users).astype(jnp.int32)
    pos_items = jax.random.randint(k_p, (batch,), n_users, n_nodes).astype(jnp.int32)
    neg_items = jax.random.randint(k_n, (batch,), n_users, n_nodes).astype(jnp.int32)

    outs = cagcn_forward(embeds, edge_index, trend, users, pos_items, neg_items,
                         n_users=n_users, n_hops=n_hops)
    outs = jax.block_until_ready(outs)

    # sanity check against pure-JAX f32 scatter reference (bf16 W / agg in the
    # kernel loosens tolerance slightly)
    pooled_ref = reference_pooled(embeds, edge_index, trend,
                                  n_nodes=n_nodes, n_hops=n_hops)
    user_ref = pooled_ref[:n_users][users]
    pos_ref = pooled_ref[n_users:][pos_items - n_users]
    neg_ref = pooled_ref[n_users:][neg_items - n_users]
    assert jnp.allclose(outs[0], user_ref, atol=5e-3, rtol=5e-2)
    assert jnp.allclose(outs[1], pos_ref, atol=5e-3, rtol=5e-2)
    assert jnp.allclose(outs[2], neg_ref, atol=5e-3, rtol=5e-2)
    assert jnp.allclose(outs[3], embeds[users])
    assert jnp.allclose(outs[4], embeds[pos_items])
    assert jnp.allclose(outs[5], embeds[neg_items])

    print("KERNEL_OK")
</pallas_src>

<mosaic_0001>
module attributes {stable_mosaic.version = 11 : i64} {
  func.func @_hop_kernel(%arg0: i32, %arg1: i32, %arg2: memref<4xi32, #tpu.memory_space<smem>>, %arg3: memref<2xi32, #tpu.memory_space<smem>>, %arg4: memref<128x128xbf16, #tpu.memory_space<vmem>>, %arg5: memref<128x128xbf16, #tpu.memory_space<vmem>>, %arg6: memref<128x128xf32, #tpu.memory_space<vmem>>, %arg7: memref<128x128xbf16, #tpu.memory_space<vmem>>, %arg8: memref<128x128xf32, #tpu.memory_space<vmem>>, %arg9: memref<128x128xf32, #tpu.memory_space<vmem>>) attributes {dimension_semantics = [#tpu.dimension_semantics<parallel>, #tpu.dimension_semantics<arbitrary>], iteration_bounds = array<i64: 2, 2>, scalar_prefetch = 2 : i64, scratch_operands = 1 : i64, tpu.core_type = #tpu.core_type<tc>, window_params = [{transform_indices = @transform_0, window_bounds = array<i64: 128, 128>}, {transform_indices = @transform_1, window_bounds = array<i64: 128, 128>}, {transform_indices = @transform_2, window_bounds = array<i64: 128, 128>}, {transform_indices = @transform_3, window_bounds = array<i64: 128, 128>}, {transform_indices = @transform_4, window_bounds = array<i64: 128, 128>}]} {
    %c0_i32 = arith.constant 0 : i32
    %0 = arith.cmpi eq, %arg1, %c0_i32 : i32
    %1 = arith.extui %0 : i1 to i32
    %c0_i32_0 = arith.constant 0 : i32
    %2 = arith.cmpi ne, %1, %c0_i32_0 : i32
    scf.if %2 {
      %cst = arith.constant 0.000000e+00 : f32
      %11 = vector.broadcast %cst : f32 to vector<128x128xf32>
      %c0 = arith.constant 0 : index
      %c0_3 = arith.constant 0 : index
      %12 = vector.load %arg9[%c0, %c0_3] : memref<128x128xf32, #tpu.memory_space<vmem>>, vector<128x128xf32>
      tpu.vector_store %arg9[%c0, %c0_3], %11 {strides = array<i32>} : memref<128x128xf32, #tpu.memory_space<vmem>>, vector<128x128xf32>,
    } else {
    }
    %3 = arith.index_cast %arg0 : i32 to index
    %4 = memref.load %arg3[%3] : memref<2xi32, #tpu.memory_space<smem>>
    %5 = arith.cmpi slt, %arg1, %4 : i32
    %6 = arith.extui %5 : i1 to i32
    %c0_i32_1 = arith.constant 0 : i32
    %7 = arith.cmpi ne, %6, %c0_i32_1 : i32
    scf.if %7 {
      %c0 = arith.constant 0 : index
      %c0_3 = arith.constant 0 : index
      %11 = vector.load %arg9[%c0, %c0_3] : memref<128x128xf32, #tpu.memory_space<vmem>>, vector<128x128xf32>
      %c0_4 = arith.constant 0 : index
      %c0_5 = arith.constant 0 : index
      %12 = vector.load %arg4[%c0_4, %c0_5] : memref<128x128xbf16, #tpu.memory_space<vmem>>, vector<128x128xbf16>
      %c0_6 = arith.constant 0 : index
      %c0_7 = arith.constant 0 : index
      %13 = vector.load %arg5[%c0_6, %c0_7] : memref<128x128xbf16, #tpu.memory_space<vmem>>, vector<128x128xbf16>
      %cst = arith.constant dense<0.000000e+00> : vector<128x128xf32>
      %14 = tpu.matmul %12, %13, %cst {dimension_numbers = #tpu.dot_dimension_numbers<[1], [0], [0], [1], [0, 0, 1, 1], [], []>} : vector<128x128xbf16>, vector<128x128xbf16>, vector<128x128xf32> -> vector<128x128xf32>
      %15 = arith.addf %11, %14 : vector<128x128xf32>
      %c0_8 = arith.constant 0 : index
      %c0_9 = arith.constant 0 : index
      %16 = vector.load %arg9[%c0_8, %c0_9] : memref<128x128xf32, #tpu.memory_space<vmem>>, vector<128x128xf32>
      tpu.vector_store %arg9[%c0_8, %c0_9], %15 {strides = array<i32>} : memref<128x128xf32, #tpu.memory_space<vmem>>, vector<128x128xf32>,
    } else {
    }
    %c1_i32 = arith.constant 1 : i32
    %8 = arith.cmpi eq, %arg1, %c1_i32 : i32
    %9 = arith.extui %8 : i1 to i32
    %c0_i32_2 = arith.constant 0 : i32
    %10 = arith.cmpi ne, %9, %c0_i32_2 : i32
    scf.if %10 {
      %c0 = arith.constant 0 : index
      %c0_3 = arith.constant 0 : index
      %11 = vector.load %arg9[%c0, %c0_3] : memref<128x128xf32, #tpu.memory_space<vmem>>, vector<128x128xf32>
      %12 = arith.truncf %11 : vector<128x128xf32> to vector<128x128xbf16>
      %c0_4 = arith.constant 0 : index
      %c0_5 = arith.constant 0 : index
      %13 = vector.load %arg7[%c0_4, %c0_5] : memref<128x128xbf16, #tpu.memory_space<vmem>>, vector<128x128xbf16>
      tpu.vector_store %arg7[%c0_4, %c0_5], %12 {strides = array<i32>} : memref<128x128xbf16, #tpu.memory_space<vmem>>, vector<128x128xbf16>,
      %c0_6 = arith.constant 0 : index
      %c0_7 = arith.constant 0 : index
      %14 = vector.load %arg6[%c0_6, %c0_7] : memref<128x128xf32, #tpu.memory_space<vmem>>, vector<128x128xf32>
      %15 = arith.addf %14, %11 : vector<128x128xf32>
      %c0_8 = arith.constant 0 : index
      %c0_9 = arith.constant 0 : index
      %16 = vector.load %arg8[%c0_8, %c0_9] : memref<128x128xf32, #tpu.memory_space<vmem>>, vector<128x128xf32>
      tpu.vector_store %arg8[%c0_8, %c0_9], %15 {strides = array<i32>} : memref<128x128xf32, #tpu.memory_space<vmem>>, vector<128x128xf32>,
    } else {
    }
    return
  }
  func.func @transform_0(%arg0: i32, %arg1: i32, %arg2: memref<4xi32, #tpu.memory_space<smem>>, %arg3: memref<2xi32, #tpu.memory_space<smem>>) -> (i32, i32) {
    %c2_i32 = arith.constant 2 : i32
    %0 = arith.muli %arg0, %c2_i32 : i32
    %1 = arith.addi %0, %arg1 : i32
    %2 = arith.index_cast %1 : i32 to index
    %3 = memref.load %arg2[%2] : memref<4xi32, #tpu.memory_space<smem>>
    %c0_i32 = arith.constant 0 : i32
    return %arg0, %3 : i32, i32
  }
  func.func @transform_1(%arg0: i32, %arg1: i32, %arg2: memref<4xi32, #tpu.memory_space<smem>>, %arg3: memref<2xi32, #tpu.memory_space<smem>>) -> (i32, i32) {
    %c2_i32 = arith.constant 2 : i32
    %0 = arith.muli %arg0, %c2_i32 : i32
    %1 = arith.addi %0, %arg1 : i32
    %2 = arith.index_cast %1 : i32 to index
    %3 = memref.load %arg2[%2] : memref<4xi32, #tpu.memory_space<smem>>
    %c0_i32 = arith.constant 0 : i32
    %c0_i32_0 = arith.constant 0 : i32
    return %3, %c0_i32 : i32, i32
  }
  func.func @transform_2(%arg0: i32, %arg1: i32, %arg2: memref<4xi32, #tpu.memory_space<smem>>, %arg3: memref<2xi32, #tpu.memory_space<smem>>) -> (i32, i32) {
    %c0_i32 = arith.constant 0 : i32
    %c0_i32_0 = arith.constant 0 : i32
    return %arg0, %c0_i32 : i32, i32
  }
  func.func @transform_3(%arg0: i32, %arg1: i32, %arg2: memref<4xi32, #tpu.memory_space<smem>>, %arg3: memref<2xi32, #tpu.memory_space<smem>>) -> (i32, i32) {
    %c0_i32 = arith.constant 0 : i32
    %c0_i32_0 = arith.constant 0 : i32
    return %arg0, %c0_i32 : i32, i32
  }
  func.func @transform_4(%arg0: i32, %arg1: i32, %arg2: memref<4xi32, #tpu.memory_space<smem>>, %arg3: memref<2xi32, #tpu.memory_space<smem>>) -> (i32, i32) {
    %c0_i32 = arith.constant 0 : i32
    %c0_i32_0 = arith.constant 0 : i32
    return %arg0, %c0_i32 : i32, i32
  }
}

module attributes {stable_mosaic.version = 11 : i64} {
  func.func @_hop_kernel(%arg0: i32, %arg1: i32, %arg2: memref<4xi32, #tpu.memory_space<smem>>, %arg3: memref<2xi32, #tpu.memory_space<smem>>, %arg4: memref<128x128xbf16, #tpu.memory_space<vmem>>, %arg5: memref<128x128xbf16, #tpu.memory_space<vmem>>, %arg6: memref<128x128xf32, #tpu.memory_space<vmem>>, %arg7: memref<128x128xbf16, #tpu.memory_space<vmem>>, %arg8: memref<128x128xf32, #tpu.memory_space<vmem>>, %arg9: memref<128x128xf32, #tpu.memory_space<vmem>>) attributes {dimension_semantics = [#tpu.dimension_semantics<parallel>, #tpu.dimension_semantics<arbitrary>], iteration_bounds = array<i64: 2, 2>, scalar_prefetch = 2 : i64, scratch_operands = 1 : i64, tpu.core_type = #tpu.core_type<tc>, window_params = [{transform_indices = @transform_0, window_bounds = array<i64: 128, 128>}, {transform_indices = @transform_1, window_bounds = array<i64: 128, 128>}, {transform_indices = @transform_2, window_bounds = array<i64: 128, 128>}, {transform_indices = @transform_3, window_bounds = array<i64: 128, 128>}, {transform_indices = @transform_4, window_bounds = array<i64: 128, 128>}]} {
    %c0_i32 = arith.constant 0 : i32
    %0 = arith.cmpi eq, %arg1, %c0_i32 : i32
    %1 = arith.extui %0 : i1 to i32
    %c0_i32_0 = arith.constant 0 : i32
    %2 = arith.cmpi ne, %1, %c0_i32_0 : i32
    scf.if %2 {
      %cst = arith.constant 0.000000e+00 : f32
      %11 = vector.broadcast %cst : f32 to vector<128x128xf32>
      %c0 = arith.constant 0 : index
      %c0_3 = arith.constant 0 : index
      %12 = vector.load %arg9[%c0, %c0_3] : memref<128x128xf32, #tpu.memory_space<vmem>>, vector<128x128xf32>
      tpu.vector_store %arg9[%c0, %c0_3], %11 {strides = array<i32>} : memref<128x128xf32, #tpu.memory_space<vmem>>, vector<128x128xf32>,
    } else {
    }
    %3 = arith.index_cast %arg0 : i32 to index
    %4 = memref.load %arg3[%3] : memref<2xi32, #tpu.memory_space<smem>>
    %5 = arith.cmpi slt, %arg1, %4 : i32
    %6 = arith.extui %5 : i1 to i32
    %c0_i32_1 = arith.constant 0 : i32
    %7 = arith.cmpi ne, %6, %c0_i32_1 : i32
    scf.if %7 {
      %c0 = arith.constant 0 : index
      %c0_3 = arith.constant 0 : index
      %11 = vector.load %arg9[%c0, %c0_3] : memref<128x128xf32, #tpu.memory_space<vmem>>, vector<128x128xf32>
      %c0_4 = arith.constant 0 : index
      %c0_5 = arith.constant 0 : index
      %12 = vector.load %arg4[%c0_4, %c0_5] : memref<128x128xbf16, #tpu.memory_space<vmem>>, vector<128x128xbf16>
      %c0_6 = arith.constant 0 : index
      %c0_7 = arith.constant 0 : index
      %13 = vector.load %arg5[%c0_6, %c0_7] : memref<128x128xbf16, #tpu.memory_space<vmem>>, vector<128x128xbf16>
      %cst = arith.constant dense<0.000000e+00> : vector<128x128xf32>
      %14 = tpu.matmul %12, %13, %cst {dimension_numbers = #tpu.dot_dimension_numbers<[1], [0], [0], [1], [0, 0, 1, 1], [], []>} : vector<128x128xbf16>, vector<128x128xbf16>, vector<128x128xf32> -> vector<128x128xf32>
      %15 = arith.addf %11, %14 : vector<128x128xf32>
      %c0_8 = arith.constant 0 : index
      %c0_9 = arith.constant 0 : index
      %16 = vector.load %arg9[%c0_8, %c0_9] : memref<128x128xf32, #tpu.memory_space<vmem>>, vector<128x128xf32>
      tpu.vector_store %arg9[%c0_8, %c0_9], %15 {strides = array<i32>} : memref<128x128xf32, #tpu.memory_space<vmem>>, vector<128x128xf32>,
    } else {
    }
    %c1_i32 = arith.constant 1 : i32
    %8 = arith.cmpi eq, %arg1, %c1_i32 : i32
    %9 = arith.extui %8 : i1 to i32
    %c0_i32_2 = arith.constant 0 : i32
    %10 = arith.cmpi ne, %9, %c0_i32_2 : i32
    scf.if %10 {
      %c0 = arith.constant 0 : index
      %c0_3 = arith.constant 0 : index
      %11 = vector.load %arg9[%c0, %c0_3] : memref<128x128xf32, #tpu.memory_space<vmem>>, vector<128x128xf32>
      %12 = arith.truncf %11 : vector<128x128xf32> to vector<128x128xbf16>
      %c0_4 = arith.constant 0 : index
      %c0_5 = arith.constant 0 : index
      %13 = vector.load %arg7[%c0_4, %c0_5] : memref<128x128xbf16, #tpu.memory_space<vmem>>, vector<128x128xbf16>
      tpu.vector_store %arg7[%c0_4, %c0_5], %12 {strides = array<i32>} : memref<128x128xbf16, #tpu.memory_space<vmem>>, vector<128x128xbf16>,
      %c0_6 = arith.constant 0 : index
      %c0_7 = arith.constant 0 : index
      %14 = vector.load %arg6[%c0_6, %c0_7] : memref<128x128xf32, #tpu.memory_space<vmem>>, vector<128x128xf32>
      %15 = arith.addf %14, %11 : vector<128x128xf32>
      %c0_8 = arith.constant 0 : index
      %c0_9 = arith.constant 0 : index
      %16 = vector.load %arg8[%c0_8, %c0_9] : memref<128x128xf32, #tpu.memory_space<vmem>>, vector<128x128xf32>
      tpu.vector_store %arg8[%c0_8, %c0_9], %15 {strides = array<i32>} : memref<128x128xf32, #tpu.memory_space<vmem>>, vector<128x128xf32>,
    } else {
    }
    return
  }
  func.func @transform_0(%arg0: i32, %arg1: i32, %arg2: memref<4xi32, #tpu.memory_space<smem>>, %arg3: memref<2xi32, #tpu.memory_space<smem>>) -> (i32, i32) {
    %c2_i32 = arith.constant 2 : i32
    %0 = arith.muli %arg0, %c2_i32 : i32
    %1 = arith.addi %0, %arg1 : i32
    %2 = arith.index_cast %1 : i32 to index
    %3 = memref.load %arg2[%2] : memref<4xi32, #tpu.memory_space<smem>>
    %c0_i32 = arith.constant 0 : i32
    return %arg0, %3 : i32, i32
  }
  func.func @transform_1(%arg0: i32, %arg1: i32, %arg2: memref<4xi32, #tpu.memory_space<smem>>, %arg3: memref<2xi32, #tpu.memory_space<smem>>) -> (i32, i32) {
    %c2_i32 = arith.constant 2 : i32
    %0 = arith.muli %arg0, %c2_i32 : i32
    %1 = arith.addi %0, %arg1 : i32
    %2 = arith.index_cast %1 : i32 to index
    %3 = memref.load %arg2[%2] : memref<4xi32, #tpu.memory_space<smem>>
    %c0_i32 = arith.constant 0 : i32
    %c0_i32_0 = arith.constant 0 : i32
    return %3, %c0_i32 : i32, i32
  }
  func.func @transform_2(%arg0: i32, %arg1: i32, %arg2: memref<4xi32, #tpu.memory_space<smem>>, %arg3: memref<2xi32, #tpu.memory_space<smem>>) -> (i32, i32) {
    %c0_i32 = arith.constant 0 : i32
    %c0_i32_0 = arith.constant 0 : i32
    return %arg0, %c0_i32 : i32, i32
  }
  func.func @transform_3(%arg0: i32, %arg1: i32, %arg2: memref<4xi32, #tpu.memory_space<smem>>, %arg3: memref<2xi32, #tpu.memory_space<smem>>) -> (i32, i32) {
    %c0_i32 = arith.constant 0 : i32
    %c0_i32_0 = arith.constant 0 : i32
    return %arg0, %c0_i32 : i32, i32
  }
  func.func @transform_4(%arg0: i32, %arg1: i32, %arg2: memref<4xi32, #tpu.memory_space<smem>>, %arg3: memref<2xi32, #tpu.memory_space<smem>>) -> (i32, i32) {
    %c0_i32 = arith.constant 0 : i32
    %c0_i32_0 = arith.constant 0 : i32
    return %arg0, %c0_i32 : i32, i32
  }
}

</mosaic_0001>

<llo_original>
// kernel: _propagate_pool_gather.5
$region0: #{_propagate_pool_gather.5}
  #allocation0 [shape = 'u32[]', space=smem, size = 0x4, offset = 0x4, fixed_abs, tag = 'smem constant byte address 0x4 - core index']
  #allocation1 [shape = 'u32[72,128]{1,0:T(1,128)}', space=vmem, size = 0x9000, scoped, tag = 'internal scratch']
  #allocation2 [shape = 'f32[128,128]{1,0:T(8,128)}', space=vmem, size = 0x10000, scoped, tag = 'scratch operand']
  #allocation3 [shape = 's32[1]{0}', space=sflag, size = 0x4, scoped, tag = 'scoped memory for _propagate_pool_gather.5']
  #allocation4 [shape = 'u8[512]{0}', space=smem, size = 0x200, scoped, tag = 'prefetched SMEM operand 0']
  #allocation5 [shape = 'u8[512]{0}', space=smem, size = 0x200, scoped, tag = 'prefetched SMEM operand 1']
  %s0 = inlined_call_operand.vmem [shape: s32[4], index: 0, kind: input, shape index: {}]
  %s1 = inlined_call_operand.vmem [shape: s32[2], index: 1, kind: input, shape index: {}]
  %s2 = inlined_call_operand.vmem [shape: bf16[256,256], index: 2, kind: input, shape index: {}]
  %s3 = inlined_call_operand.vmem [shape: bf16[256,128], index: 3, kind: input, shape index: {}]
  %s4 = inlined_call_operand.vmem [shape: f32[256,128], index: 4, kind: input, shape index: {}, may-alias: {4,6}]
  %s5 = inlined_call_operand.hbm [shape: bf16[256,128], index: 5, kind: output, shape index: {0}]
  %s6 = inlined_call_operand.vmem [shape: f32[256,128], index: 6, kind: output, shape index: {1}, may-alias: {4,6}]
  %7 = xla_tuple %s5, %s6
  %s8 = sld [smem:[#allocation0]]
  $region106: #{_propagate_pool_gather.5} parent=0
    _
  %s10 = ssub.s32 1, %s8
  %s11 = scalar_select 0, %s10, %s8
  %s13 = sshll.u32 %s0, 4
  %s14 = int_to_ptr.vmem [resolvable:$true] %s13
  %16 = dma.vmem_to_smem %s14, 16, [#allocation4], [#allocation3]
  %s18 = sshll.u32 %s1, 4
  %s19 = int_to_ptr.vmem [resolvable:$true] %s18
  %21 = dma.vmem_to_smem %s19, 16, [#allocation5], [#allocation3]
  %23 = dma.done [#allocation3], 32
  %24 = sfence
  $region1: #{_propagate_pool_gather.5} parent=0
    #allocation6 [shape = 'u8[65536]{0}', space=vmem, size = 0x10000, scoped, tag = 'input window, operand 2']
    #allocation7 [shape = 'u8[65536]{0}', space=vmem, size = 0x10000, scoped, tag = 'output window, operand 0']
    #allocation8 [shape = 's32[2]{0}', space=sflag, size = 0x8, scoped, tag = 'scoped memory for _propagate_pool_gather.5']
    %25 = vsyncpa [#allocation8], 0
    %s26 = scalar_lea.sflag [#allocation8], 1
    %27 = vsyncpa %s26, 0
    loop: start=0, step=1, limit=6
    $region2: #{_propagate_pool_gather.5} parent=1 // loop_pre_header
      _
    $region3: #{_propagate_pool_gather.5} parent=1 // loop_header
      %s29 = sphi 0, %s33
      %p30 = scmp.ge.s32.totalorder %s29, 6
      %s36 = sphi 0, %s48
      %s37 = sphi 0, %s44
      %s38 = sphi 0, %s36
      %s39 = sphi 0, %s37
      %s40 = sphi 0, %s38
      %s41 = sphi 0, %s39
      %s59 = sphi 0, %s61
      %s62 = sphi 0, %s59
      %s63 = sphi 0, %s62
      %s79 = sphi 0, %s63
      %s91 = sphi 0, %s93
      %s94 = sphi 0, %s91
      %s95 = sphi 0, %s94
      %s111 = sphi 0, %s95
      %s117 = sphi 0, %s119
      %s120 = sphi 0, %s117
      %s121 = sphi 0, %s120
      %s137 = sphi 0, %s121
      %s143 = sphi 0, %s145
      %s146 = sphi 0, %s143
      %s147 = sphi 0, %s146
      %s163 = sphi 0, %s147
      %s169 = sphi 0, %s171
      %s172 = sphi 0, %s169
      %s173 = sphi 0, %s172
      %s189 = sphi 0, %s173
    $region4: #{_propagate_pool_gather.5} parent=1 // loop_header_branch
      %32 = sbr.rel (%p30) target = $region8
    $region5: #{_propagate_pool_gather.5} parent=1 // loop_body
      %s34 = ssub.s32 %s29, 1
      %s35 = ssub.s32 %s29, 2
      %s42 = sadd.s32 1, %s37
      %p43 = scmp.ge.s32.totalorder %s42, 2
      %s44 = scalar_select %p43, 0, %s42
      %s45 = sadd.s32 1, %s36
      %s46 = scalar_select %p43, %s45, %s36
      %p47 = scmp.ge.s32.totalorder %s46, 2
      %s48 = scalar_select %p47, 0, %s46
      %s49 = smul.u32 %s36, 2
      %s50 = sadd.s32 %s49, %s37
      %s51 = sld [smem:[#allocation4 + %s50]]
      %s52 = smul.u32 %s48, 2
      %s53 = sadd.s32 %s52, %s44
      %s54 = sld [smem:[#allocation4 + %s53]]
      %s55 = ssub.s32 %s36, %s48
      %s56 = ssub.s32 %s51, %s54
      %s57 = sor.u32 %s55, %s56
      %p58 = scmp.eq.s32.totalorder %s57, 0
      %s60 = sadd.s32 %s59, 1
      %s61 = scalar_select %p58, %s59, %s60
      %p64 = pneg %p58
      %p65 = scmp.eq.s32.totalorder %s29, 3
      %p66 = por %p64, %p65
      %p67 = scmp.ne.s32.totalorder %s59, %s62
      %p68 = scmp.eq.s32.totalorder %s29, 0
      %p69 = por %p67, %p68
      %p70 = scmp.ne.s32.totalorder %s59, %s62
      %p71 = scmp.eq.s32.totalorder %s34, 3
      %p72 = por %p70, %p71
      %p73 = scmp.ne.s32.totalorder %s62, %s63
      %p74 = scmp.eq.s32.totalorder %s34, 0
      %p75 = por %p73, %p74
      %p76 = scmp.ne.s32.totalorder %s62, %s63
      %p77 = scmp.eq.s32.totalorder %s35, 3
      %p78 = por %p76, %p77
      %p80 = scmp.ne.s32.totalorder %s63, %s79
      %p81 = scmp.eq.s32.totalorder %s35, 0
      %p82 = por %p80, %p81
      %s83 = smul.u32 %s36, 2
      %s84 = sadd.s32 %s83, %s37
      %s85 = sld [smem:[#allocation4 + %s84]]
      %s86 = smul.u32 %s48, 2
      %s87 = sadd.s32 %s86, %s44
      %s88 = sld [smem:[#allocation4 + %s87]]
      %s89 = ssub.s32 %s85, %s88
      %p90 = scmp.eq.s32.totalorder %s89, 0
      %s92 = sadd.s32 %s91, 1
      %s93 = scalar_select %p90, %s91, %s92
      %p96 = pneg %p90
      %p97 = scmp.eq.s32.totalorder %s29, 3
      %p98 = por %p96, %p97
      %p99 = scmp.ne.s32.totalorder %s91, %s94
      %p100 = scmp.eq.s32.totalorder %s29, 0
      %p101 = por %p99, %p100
      %p102 = scmp.ne.s32.totalorder %s91, %s94
      %p103 = scmp.eq.s32.totalorder %s34, 3
      %p104 = por %p102, %p103
      %p105 = scmp.ne.s32.totalorder %s94, %s95
      %p106 = scmp.eq.s32.totalorder %s34, 0
      %p107 = por %p105, %p106
      %p108 = scmp.ne.s32.totalorder %s94, %s95
      %p109 = scmp.eq.s32.totalorder %s35, 3
      %p110 = por %p108, %p109
      %p112 = scmp.ne.s32.totalorder %s95, %s111
      %p113 = scmp.eq.s32.totalorder %s35, 0
      %p114 = por %p112, %p113
      %s115 = ssub.s32 %s36, %s48
      %p116 = scmp.eq.s32.totalorder %s115, 0
      %s118 = sadd.s32 %s117, 1
      %s119 = scalar_select %p116, %s117, %s118
      %p122 = pneg %p116
      %p123 = scmp.eq.s32.totalorder %s29, 3
      %p124 = por %p122, %p123
      %p125 = scmp.ne.s32.totalorder %s117, %s120
      %p126 = scmp.eq.s32.totalorder %s29, 0
      %p127 = por %p125, %p126
      %p128 = scmp.ne.s32.totalorder %s117, %s120
      %p129 = scmp.eq.s32.totalorder %s34, 3
      %p130 = por %p128, %p129
      %p131 = scmp.ne.s32.totalorder %s120, %s121
      %p132 = scmp.eq.s32.totalorder %s34, 0
      %p133 = por %p131, %p132
      %p134 = scmp.ne.s32.totalorder %s120, %s121
      %p135 = scmp.eq.s32.totalorder %s35, 3
      %p136 = por %p134, %p135
      %p138 = scmp.ne.s32.totalorder %s121, %s137
      %p139 = scmp.eq.s32.totalorder %s35, 0
      %p140 = por %p138, %p139
      %s141 = ssub.s32 %s36, %s48
      %p142 = scmp.eq.s32.totalorder %s141, 0
      %s144 = sadd.s32 %s143, 1
      %s145 = scalar_select %p142, %s143, %s144
      %p148 = pneg %p142
      %p149 = scmp.eq.s32.totalorder %s29, 3
      %p150 = por %p148, %p149
      %p151 = scmp.ne.s32.totalorder %s143, %s146
      %p152 = scmp.eq.s32.totalorder %s29, 0
      %p153 = por %p151, %p152
      %p154 = scmp.ne.s32.totalorder %s143, %s146
      %p155 = scmp.eq.s32.totalorder %s34, 3
      %p156 = por %p154, %p155
      %p157 = scmp.ne.s32.totalorder %s146, %s147
      %p158 = scmp.eq.s32.totalorder %s34, 0
      %p159 = por %p157, %p158
      %p160 = scmp.ne.s32.totalorder %s146, %s147
      %p161 = scmp.eq.s32.totalorder %s35, 3
      %p162 = por %p160, %p161
      %p164 = scmp.ne.s32.totalorder %s147, %s163
      %p165 = scmp.eq.s32.totalorder %s35, 0
      %p166 = por %p164, %p165
      %s167 = ssub.s32 %s36, %s48
      %p168 = scmp.eq.s32.totalorder %s167, 0
      %s170 = sadd.s32 %s169, 1
      %s171 = scalar_select %p168, %s169, %s170
      %p174 = pneg %p168
      %p175 = scmp.eq.s32.totalorder %s29, 3
      %p176 = por %p174, %p175
      %p177 = scmp.ne.s32.totalorder %s169, %s172
      %p178 = scmp.eq.s32.totalorder %s29, 0
      %p179 = por %p177, %p178
      %p180 = scmp.ne.s32.totalorder %s169, %s172
      %p181 = scmp.eq.s32.totalorder %s34, 3
      %p182 = por %p180, %p181
      %p183 = scmp.ne.s32.totalorder %s172, %s173
      %p184 = scmp.eq.s32.totalorder %s34, 0
      %p185 = por %p183, %p184
      %p186 = scmp.ne.s32.totalorder %s172, %s173
      %p187 = scmp.eq.s32.totalorder %s35, 3
      %p188 = por %p186, %p187
      %p190 = scmp.ne.s32.totalorder %s173, %s189
      %p191 = scmp.eq.s32.totalorder %s35, 0
      %p192 = por %p190, %p191
      %p193 = scmp.le.s32.totalorder 1, %s29
      %p194 = scmp.lt.s32.totalorder %s29, 5
      %p195 = pnand %p193, %p194
      %p196 = pneg %p195
      // Predicated region
      $region9: #{_propagate_pool_gather.5} parent=5 // pred_check
        _
      $region10: #{_propagate_pool_gather.5} parent=5 // pred_check_branch
        %198 = sbr.rel (%p195) target = $region12
      $region11: #{_propagate_pool_gather.5} parent=5 // pred_region
        %s199 = ssub.s32 %s29, 1
      $region12: #{_propagate_pool_gather.5} parent=5 // pred_fallthru
        _
      %p200 = scmp.lt.s32.totalorder %s29, 4
      // Predicated region
      $region13: #{_propagate_pool_gather.5} parent=5 // pred_check
        %p201 = pneg %p200
      $region14: #{_propagate_pool_gather.5} parent=5 // pred_check_branch
        %203 = sbr.rel (%p201) target = $region16
      $region15: #{_propagate_pool_gather.5} parent=5 // pred_region
        // Predicated region
        $region17: #{_propagate_pool_gather.5} parent=15 // pred_check
          %p204 = pneg %p69
        $region18: #{_propagate_pool_gather.5} parent=15 // pred_check_branch
          %206 = sbr.rel (%p204) target = $region20
        $region19: #{_propagate_pool_gather.5} parent=15 // pred_region
          %s207 = sand.u32 %s59, 1
          %s208 = sand.u32 %s59, 1
          %s209 = smul.addr %s208, 64
          %s210 = scalar_lea.vmem [#allocation6], %s209
          %s211 = smul.u32 %s36, 2
          %s212 = sadd.s32 %s211, %s37
          %s213 = sld [smem:[#allocation4 + %s212]]
          %s214 = smul.u32 16, %s36
          %s215 = smul.addr %s214, 2
          %s216 = sadd.s32 %s213, %s215
          %s217 = smul.addr %s216, 4
          %s218 = scalar_lea.vmem %s2, %s217
          // Predicated region
          $region21: #{_propagate_pool_gather.5} parent=19 // pred_check
            _
          $region22: #{_propagate_pool_gather.5} parent=19 // pred_check_branch
            %220 = sbr.rel (0) target = $region24
          $region23: #{_propagate_pool_gather.5} parent=19 // pred_region
            // Predicated region
            $region25: #{_propagate_pool_gather.5} parent=23 // pred_check
              _
            $region26: #{_propagate_pool_gather.5} parent=23 // pred_check_branch
              %222 = sbr.rel target = $region28
            $region27: #{_propagate_pool_gather.5} parent=23 // pred_region
              // Predicated region
              $region40: #{_propagate_pool_gather.5} parent=27 // pred_check
                _
              $region41: #{_propagate_pool_gather.5} parent=27 // pred_check_branch
                %268 = sbr.rel (0) target = $region43
              $region42: #{_propagate_pool_gather.5} parent=27 // pred_region
                loop: start=0, step=1, limit=1
                $region44: #{_propagate_pool_gather.5} parent=42 // loop_pre_header
                  _
                $region45: #{_propagate_pool_gather.5} parent=42 // loop_header
                  %s270 = sphi 0, %s274
                  %p271 = scmp.ge.s32.totalorder %s270, 1
                  %s275 = sphi %s218, %s218
                  %s276 = sphi %s210, %s210
                $region46: #{_propagate_pool_gather.5} parent=42 // loop_header_branch
                  %273 = sbr.rel (%p271) target = $region50
                $region47: #{_propagate_pool_gather.5} parent=42 // loop_body
                  _
                $region48: #{_propagate_pool_gather.5} parent=42 // loop_footer
                  %s274 = sadd.s32 1, %s270
                $region49: #{_propagate_pool_gather.5} parent=42 // loop_footer_branch
                  %269 = sbr.rel target = $region45
                $region50: #{_propagate_pool_gather.5} parent=42 // loop_exit
                  _
                %s278 = ssub.s32 16, 1
                loop: start=0, step=1, limit=1
                $region51: #{_propagate_pool_gather.5} parent=42 // loop_pre_header
                  _
                $region52: #{_propagate_pool_gather.5} parent=42 // loop_header
                  %s280 = sphi 0, %s284
                  %p281 = scmp.ge.s32.totalorder %s280, 1
                  %s285 = sphi %s218, %s218
                  %s286 = sphi %s210, %s210
                $region53: #{_propagate_pool_gather.5} parent=42 // loop_header_branch
                  %283 = sbr.rel (%p281) target = $region57
                $region54: #{_propagate_pool_gather.5} parent=42 // loop_body
                  %v287 = vld [vmem:[%s285] sm:%s278]
                  %288 = vst [vmem:[%s286] sm:%s278] %v287
                  %v289 = vld [vmem:[%s285 + $0x8] sm:%s278]
                  %290 = vst [vmem:[%s286 + $0x4] sm:%s278] %v289
                  %v291 = vld [vmem:[%s285 + $0x10] sm:%s278]
                  %292 = vst [vmem:[%s286 + $0x8] sm:%s278] %v291
                  %v293 = vld [vmem:[%s285 + $0x18] sm:%s278]
                  %294 = vst [vmem:[%s286 + $0xc] sm:%s278] %v293
                  %v295 = vld [vmem:[%s285 + $0x20] sm:%s278]
                  %296 = vst [vmem:[%s286 + $0x10] sm:%s278] %v295
                  %v297 = vld [vmem:[%s285 + $0x28] sm:%s278]
                  %298 = vst [vmem:[%s286 + $0x14] sm:%s278] %v297
                  %v299 = vld [vmem:[%s285 + $0x30] sm:%s278]
                  %300 = vst [vmem:[%s286 + $0x18] sm:%s278] %v299
                  %v301 = vld [vmem:[%s285 + $0x38] sm:%s278]
                  %302 = vst [vmem:[%s286 + $0x1c] sm:%s278] %v301
                  %v303 = vld [vmem:[%s285 + $0x40] sm:%s278]
                  %304 = vst [vmem:[%s286 + $0x20] sm:%s278] %v303
                  %v305 = vld [vmem:[%s285 + $0x48] sm:%s278]
                  %306 = vst [vmem:[%s286 + $0x24] sm:%s278] %v305
                  %v307 = vld [vmem:[%s285 + $0x50] sm:%s278]
                  %308 = vst [vmem:[%s286 + $0x28] sm:%s278] %v307
                  %v309 = vld [vmem:[%s285 + $0x58] sm:%s278]
                  %310 = vst [vmem:[%s286 + $0x2c] sm:%s278] %v309
                  %v311 = vld [vmem:[%s285 + $0x60] sm:%s278]
                  %312 = vst [vmem:[%s286 + $0x30] sm:%s278] %v311
                  %v313 = vld [vmem:[%s285 + $0x68] sm:%s278]
                  %314 = vst [vmem:[%s286 + $0x34] sm:%s278] %v313
                  %v315 = vld [vmem:[%s285 + $0x70] sm:%s278]
                  %316 = vst [vmem:[%s286 + $0x38] sm:%s278] %v315
                  %v317 = vld [vmem:[%s285 + $0x78] sm:%s278]
                  %318 = vst [vmem:[%s286 + $0x3c] sm:%s278] %v317
                $region55: #{_propagate_pool_gather.5} parent=42 // loop_footer
                  %s284 = sadd.s32 1, %s280
                $region56: #{_propagate_pool_gather.5} parent=42 // loop_footer_branch
                  %279 = sbr.rel target = $region52
                $region57: #{_propagate_pool_gather.5} parent=42 // loop_exit
                  _
              $region43: #{_propagate_pool_gather.5} parent=27 // pred_fallthru
                _
            $region28: #{_propagate_pool_gather.5} parent=23 // pred_fallthru
              _
            // Predicated region
            $region29: #{_propagate_pool_gather.5} parent=23 // pred_check
              _
            $region30: #{_propagate_pool_gather.5} parent=23 // pred_check_branch
              %224 = sbr.rel (0) target = $region32
            $region31: #{_propagate_pool_gather.5} parent=23 // pred_region
              %s226 = ssub.s32 16, 1
              loop: start=0, step=1, limit=1
              $region33: #{_propagate_pool_gather.5} parent=31 // loop_pre_header
                _
              $region34: #{_propagate_pool_gather.5} parent=31 // loop_header
                %s228 = sphi 0, %s232
                %p229 = scmp.ge.s32.totalorder %s228, 1
                %s233 = sphi %s218, %s218
                %s234 = sphi %s210, %s210
              $region35: #{_propagate_pool_gather.5} parent=31 // loop_header_branch
                %231 = sbr.rel (%p229) target = $region39
              $region36: #{_propagate_pool_gather.5} parent=31 // loop_body
                %v235 = vld [vmem:[%s233] sm:%s226]
                %236 = vst [vmem:[%s234] sm:%s226] %v235
                %v237 = vld [vmem:[%s233 + $0x8] sm:%s226]
                %238 = vst [vmem:[%s234 + $0x4] sm:%s226] %v237
                %v239 = vld [vmem:[%s233 + $0x10] sm:%s226]
                %240 = vst [vmem:[%s234 + $0x8] sm:%s226] %v239
                %v241 = vld [vmem:[%s233 + $0x18] sm:%s226]
                %242 = vst [vmem:[%s234 + $0xc] sm:%s226] %v241
                %v243 = vld [vmem:[%s233 + $0x20] sm:%s226]
                %244 = vst [vmem:[%s234 + $0x10] sm:%s226] %v243
                %v245 = vld [vmem:[%s233 + $0x28] sm:%s226]
                %246 = vst [vmem:[%s234 + $0x14] sm:%s226] %v245
                %v247 = vld [vmem:[%s233 + $0x30] sm:%s226]
                %248 = vst [vmem:[%s234 + $0x18] sm:%s226] %v247
                %v249 = vld [vmem:[%s233 + $0x38] sm:%s226]
                %250 = vst [vmem:[%s234 + $0x1c] sm:%s226] %v249
                %v251 = vld [vmem:[%s233 + $0x40] sm:%s226]
                %252 = vst [vmem:[%s234 + $0x20] sm:%s226] %v251
                %v253 = vld [vmem:[%s233 + $0x48] sm:%s226]
                %254 = vst [vmem:[%s234 + $0x24] sm:%s226] %v253
                %v255 = vld [vmem:[%s233 + $0x50] sm:%s226]
                %256 = vst [vmem:[%s234 + $0x28] sm:%s226] %v255
                %v257 = vld [vmem:[%s233 + $0x58] sm:%s226]
                %258 = vst [vmem:[%s234 + $0x2c] sm:%s226] %v257
                %v259 = vld [vmem:[%s233 + $0x60] sm:%s226]
                %260 = vst [vmem:[%s234 + $0x30] sm:%s226] %v259
                %v261 = vld [vmem:[%s233 + $0x68] sm:%s226]
                %262 = vst [vmem:[%s234 + $0x34] sm:%s226] %v261
                %v263 = vld [vmem:[%s233 + $0x70] sm:%s226]
                %264 = vst [vmem:[%s234 + $0x38] sm:%s226] %v263
                %v265 = vld [vmem:[%s233 + $0x78] sm:%s226]
                %266 = vst [vmem:[%s234 + $0x3c] sm:%s226] %v265
              $region37: #{_propagate_pool_gather.5} parent=31 // loop_footer
                %s232 = sadd.s32 1, %s228
              $region38: #{_propagate_pool_gather.5} parent=31 // loop_footer_branch
                %227 = sbr.rel target = $region34
              $region39: #{_propagate_pool_gather.5} parent=31 // loop_exit
                _
            $region32: #{_propagate_pool_gather.5} parent=23 // pred_fallthru
              _
          $region24: #{_propagate_pool_gather.5} parent=19 // pred_fallthru
            _
          %319 = vnop
        $region20: #{_propagate_pool_gather.5} parent=15 // pred_fallthru
          _
        // Predicated region
        $region58: #{_propagate_pool_gather.5} parent=15 // pred_check
          %p320 = pneg %p101
        $region59: #{_propagate_pool_gather.5} parent=15 // pred_check_branch
          %322 = sbr.rel (%p320) target = $region61
        $region60: #{_propagate_pool_gather.5} parent=15 // pred_region
          %s323 = smul.u32 %s36, 2
          %s324 = sadd.s32 %s323, %s37
          %s325 = sld [smem:[#allocation4 + %s324]]
          %s326 = smul.u32 16, %s325
          %p327 = scmp.lt.s32.totalorder %s326, 31
          %s328 = scalar_select %p327, %s326, 31
          %s329 = smul.addr %s328, 4
          %s330 = scalar_lea.vmem %s3, %s329
          %s331 = smul.u32 %s36, 2
          %s332 = sadd.s32 %s331, %s37
          %s333 = sld [smem:[#allocation4 + %s332]]
          %s334 = smul.u32 16, %s333
        $region61: #{_propagate_pool_gather.5} parent=15 // pred_fallthru
          _
        // Predicated region
        $region62: #{_propagate_pool_gather.5} parent=15 // pred_check
          %p335 = pneg %p127
        $region63: #{_propagate_pool_gather.5} parent=15 // pred_check_branch
          %337 = sbr.rel (%p335) target = $region65
        $region64: #{_propagate_pool_gather.5} parent=15 // pred_region
          %s338 = smul.u32 16, %s36
          %p339 = scmp.lt.s32.totalorder %s338, 31
          %s340 = scalar_select %p339, %s338, 31
          %s341 = smul.addr %s340, 8
          %s342 = scalar_lea.vmem %s4, %s341
          %s343 = smul.u32 16, %s36
        $region65: #{_propagate_pool_gather.5} parent=15 // pred_fallthru
          _
      $region16: #{_propagate_pool_gather.5} parent=5 // pred_fallthru
        _
      %p344 = scmp.le.s32.totalorder 1, %s29
      %p345 = scmp.lt.s32.totalorder %s29, 5
      %p346 = pnand %p344, %p345
      %p347 = pneg %p346
      // Predicated region
      $region66: #{_propagate_pool_gather.5} parent=5 // pred_check
        _
      $region67: #{_propagate_pool_gather.5} parent=5 // pred_check_branch
        %349 = sbr.rel (%p346) target = $region69
      $region68: #{_propagate_pool_gather.5} parent=5 // pred_region
        %s350 = ssub.s32 %s29, 1
        %s351 = sand.u32 %s62, 1
        %s352 = sand.u32 %s62, 1
        %s353 = smul.addr %s352, 64
        %s354 = scalar_lea.vmem [#allocation6], %s353
        // Predicated region
        $region70: #{_propagate_pool_gather.5} parent=68 // pred_check
          %p355 = pneg %p75
        $region71: #{_propagate_pool_gather.5} parent=68 // pred_check_branch
          %357 = sbr.rel (%p355) target = $region73
        $region72: #{_propagate_pool_gather.5} parent=68 // pred_region
          _
        $region73: #{_propagate_pool_gather.5} parent=68 // pred_fallthru
          _
        %s358 = sand.u32 %s62, 1
        %s359 = sand.u32 %s62, 1
        %s360 = smul.addr %s359, 64
        %s361 = scalar_lea.vmem [#allocation6], %s360
        %p362 = pneg %p75
        %p363 = pneg %p72
        %s364 = smul.u32 %s38, 2
        %s365 = sadd.s32 %s364, %s39
        %s366 = sld [smem:[#allocation4 + %s365]]
        %s367 = smul.u32 16, %s366
        %p368 = scmp.lt.s32.totalorder %s367, 31
        %s369 = scalar_select %p368, %s367, 31
        %s370 = smul.addr %s369, 4
        %s371 = scalar_lea.vmem %s3, %s370
        %p372 = pneg %p107
        %p373 = pneg %p104
        %s374 = smul.u32 16, %s38
        %p375 = scmp.lt.s32.totalorder %s374, 31
        %s376 = scalar_select %p375, %s374, 31
        %s377 = smul.addr %s376, 8
        %s378 = scalar_lea.vmem %s4, %s377
        %p379 = pneg %p133
        %p380 = pneg %p130
        %p381 = pneg %p159
        %p382 = pneg %p156
        %s383 = sand.u32 %s146, 1
        %s384 = scalar_lea.sflag [#allocation8], %s383
        %s385 = sand.u32 %s146, 1
        %s386 = smul.addr %s385, 64
        %s387 = scalar_lea.vmem [#allocation7], %s386
        %p388 = pneg %p185
        %p389 = pneg %p182
        %s390 = smul.u32 16, %s38
        %p391 = scmp.lt.s32.totalorder %s390, 31
        %s392 = scalar_select %p391, %s390, 31
        %s393 = smul.addr %s392, 8
        %s394 = scalar_lea.vmem %s6, %s393
        %s395 = smul.u32 %s38, 2
        %s396 = sadd.s32 %s395, %s39
        %s397 = sld [smem:[#allocation4 + %s396]]
        %s398 = smul.u32 16, %s38
        %s399 = smul.u32 %s38, 2
        %s400 = sadd.s32 %s399, %s39
        %s401 = sld [smem:[#allocation4 + %s400]]
        %s402 = smul.u32 16, %s401
        %p403 = scmp.lt.s32.totalorder %s402, 31
        %s404 = scalar_select %p403, %s402, 31
        %s405 = smul.addr %s404, 4
        %s406 = scalar_lea.vmem %s3, %s405
        %s407 = smul.u32 %s38, 2
        %s408 = sadd.s32 %s407, %s39
        %s409 = sld [smem:[#allocation4 + %s408]]
        %s410 = smul.u32 16, %s409
        %s411 = smul.u32 16, %s38
        %p412 = scmp.lt.s32.totalorder %s411, 31
        %s413 = scalar_select %p412, %s411, 31
        %s414 = smul.addr %s413, 8
        %s415 = scalar_lea.vmem %s4, %s414
        %s416 = smul.u32 16, %s38
        %s417 = smul.u32 16, %s38
        %s418 = smul.u32 16, %s38
        %p419 = scmp.lt.s32.totalorder %s418, 31
        %s420 = scalar_select %p419, %s418, 31
        %s421 = smul.addr %s420, 8
        %s422 = scalar_lea.vmem %s6, %s421
        %s423 = smul.u32 16, %s38
        %p424 = scmp.eq.s32.totalorder %s39, 0
        // Predicated region
        $region74: #{_propagate_pool_gather.5} parent=68 // pred_check
          %p425 = pneg %p424
        $region75: #{_propagate_pool_gather.5} parent=68 // pred_check_branch
          %427 = sbr.rel (%p425) target = $region77
        $region76: #{_propagate_pool_gather.5} parent=68 // pred_region
          %428 = vst [vmem:[#allocation2] sm:$0xff] 0.0
          %429 = vst [vmem:[#allocation2 + $0x8] sm:$0xff] 0.0
          %430 = vst [vmem:[#allocation2 + $0x10] sm:$0xff] 0.0
          %431 = vst [vmem:[#allocation2 + $0x18] sm:$0xff] 0.0
          %432 = vst [vmem:[#allocation2 + $0x20] sm:$0xff] 0.0
          %433 = vst [vmem:[#allocation2 + $0x28] sm:$0xff] 0.0
          %434 = vst [vmem:[#allocation2 + $0x30] sm:$0xff] 0.0
          %435 = vst [vmem:[#allocation2 + $0x38] sm:$0xff] 0.0
          %436 = vst [vmem:[#allocation2 + $0x40] sm:$0xff] 0.0
          %437 = vst [vmem:[#allocation2 + $0x48] sm:$0xff] 0.0
          %438 = vst [vmem:[#allocation2 + $0x50] sm:$0xff] 0.0
          %439 = vst [vmem:[#allocation2 + $0x58] sm:$0xff] 0.0
          %440 = vst [vmem:[#allocation2 + $0x60] sm:$0xff] 0.0
          %441 = vst [vmem:[#allocation2 + $0x68] sm:$0xff] 0.0
          %442 = vst [vmem:[#allocation2 + $0x70] sm:$0xff] 0.0
          %443 = vst [vmem:[#allocation2 + $0x78] sm:$0xff] 0.0
        $region77: #{_propagate_pool_gather.5} parent=68 // pred_fallthru
          _
        %s444 = sld [smem:[#allocation5 + %s38]]
        %p445 = scmp.lt.s32.totalorder %s39, %s444
        // Predicated region
        $region78: #{_propagate_pool_gather.5} parent=68 // pred_check
          %p446 = pneg %p445
        $region79: #{_propagate_pool_gather.5} parent=68 // pred_check_branch
          %448 = sbr.rel (%p446) target = $region81
        $region80: #{_propagate_pool_gather.5} parent=68 // pred_region
          %v449 = vld [vmem:[#allocation2] sm:$0xff]
          %v450 = vld [vmem:[#allocation2 + $0x8] sm:$0xff]
          %v451 = vld [vmem:[#allocation2 + $0x10] sm:$0xff]
          %v452 = vld [vmem:[#allocation2 + $0x18] sm:$0xff]
          %v453 = vld [vmem:[#allocation2 + $0x20] sm:$0xff]
          %v454 = vld [vmem:[#allocation2 + $0x28] sm:$0xff]
          %v455 = vld [vmem:[#allocation2 + $0x30] sm:$0xff]
          %v456 = vld [vmem:[#allocation2 + $0x38] sm:$0xff]
          %v457 = vld [vmem:[#allocation2 + $0x40] sm:$0xff]
          %v458 = vld [vmem:[#allocation2 + $0x48] sm:$0xff]
          %v459 = vld [vmem:[#allocation2 + $0x50] sm:$0xff]
          %v460 = vld [vmem:[#allocation2 + $0x58] sm:$0xff]
          %v461 = vld [vmem:[#allocation2 + $0x60] sm:$0xff]
          %v462 = vld [vmem:[#allocation2 + $0x68] sm:$0xff]
          %v463 = vld [vmem:[#allocation2 + $0x70] sm:$0xff]
          %v464 = vld [vmem:[#allocation2 + $0x78] sm:$0xff]
          %v465 = vld [vmem:[%s354] sm:$0xf]
          %v466 = vld [vmem:[%s354 + $0x4] sm:$0xf]
          %v467 = vld [vmem:[%s354 + $0x8] sm:$0xf]
          %v468 = vld [vmem:[%s354 + $0xc] sm:$0xf]
          %v469 = vld [vmem:[%s354 + $0x10] sm:$0xf]
          %v470 = vld [vmem:[%s354 + $0x14] sm:$0xf]
          %v471 = vld [vmem:[%s354 + $0x18] sm:$0xf]
          %v472 = vld [vmem:[%s354 + $0x1c] sm:$0xf]
          %v473 = vld [vmem:[%s354 + $0x20] sm:$0xf]
          %v474 = vld [vmem:[%s354 + $0x24] sm:$0xf]
          %v475 = vld [vmem:[%s354 + $0x28] sm:$0xf]
          %v476 = vld [vmem:[%s354 + $0x2c] sm:$0xf]
          %v477 = vld [vmem:[%s354 + $0x30] sm:$0xf]
          %v478 = vld [vmem:[%s354 + $0x34] sm:$0xf]
          %v479 = vld [vmem:[%s354 + $0x38] sm:$0xf]
          %v480 = vld [vmem:[%s354 + $0x3c] sm:$0xf]
          %v481 = vld [vmem:[%s406] sm:$0xf]
          %v482 = vld [vmem:[%s406 + $0x4] sm:$0xf]
          %v483 = vld [vmem:[%s406 + $0x8] sm:$0xf]
          %v484 = vld [vmem:[%s406 + $0xc] sm:$0xf]
          %v485 = vld [vmem:[%s406 + $0x10] sm:$0xf]
          %v486 = vld [vmem:[%s406 + $0x14] sm:$0xf]
          %v487 = vld [vmem:[%s406 + $0x18] sm:$0xf]
          %v488 = vld [vmem:[%s406 + $0x1c] sm:$0xf]
          %v489 = vld [vmem:[%s406 + $0x20] sm:$0xf]
          %v490 = vld [vmem:[%s406 + $0x24] sm:$0xf]
          %v491 = vld [vmem:[%s406 + $0x28] sm:$0xf]
          %v492 = vld [vmem:[%s406 + $0x2c] sm:$0xf]
          %v493 = vld [vmem:[%s406 + $0x30] sm:$0xf]
          %v494 = vld [vmem:[%s406 + $0x34] sm:$0xf]
          %v495 = vld [vmem:[%s406 + $0x38] sm:$0xf]
          %v496 = vld [vmem:[%s406 + $0x3c] sm:$0xf]
          %v513 = vunpack.c.l.b16 %v465
          %v514 = vunpack.c.l.b16 %v466
          %v515 = vunpack.c.l.b16 %v467
          %v516 = vunpack.c.l.b16 %v468
          %v517 = vunpack.c.l.b16 %v469
          %v518 = vunpack.c.l.b16 %v470
          %v519 = vunpack.c.l.b16 %v471
          %v520 = vunpack.c.l.b16 %v472
          %v521 = vunpack.c.l.b16 %v473
          %v522 = vunpack.c.l.b16 %v474
          %v523 = vunpack.c.l.b16 %v475
          %v524 = vunpack.c.l.b16 %v476
          %v525 = vunpack.c.l.b16 %v477
          %v526 = vunpack.c.l.b16 %v478
          %v527 = vunpack.c.l.b16 %v479
          %v528 = vunpack.c.l.b16 %v480
          %v529 = vpack.c.b16 %v514, %v513
          %v530 = vpack.c.b16 %v516, %v515
          %v531 = vpack.c.b16 %v518, %v517
          %v532 = vpack.c.b16 %v520, %v519
          %v533 = vpack.c.b16 %v522, %v521
          %v534 = vpack.c.b16 %v524, %v523
          %v535 = vpack.c.b16 %v526, %v525
          %v536 = vpack.c.b16 %v528, %v527
          %v561 = vunpack.c.l.b16 %v481
          %v562 = vunpack.c.l.b16 %v482
          %v563 = vunpack.c.l.b16 %v483
          %v564 = vunpack.c.l.b16 %v484
          %v565 = vunpack.c.l.b16 %v485
          %v566 = vunpack.c.l.b16 %v486
          %v567 = vunpack.c.l.b16 %v487
          %v568 = vunpack.c.l.b16 %v488
          %v569 = vunpack.c.l.b16 %v489
          %v570 = vunpack.c.l.b16 %v490
          %v571 = vunpack.c.l.b16 %v491
          %v572 = vunpack.c.l.b16 %v492
          %v573 = vunpack.c.l.b16 %v493
          %v574 = vunpack.c.l.b16 %v494
          %v575 = vunpack.c.l.b16 %v495
          %v576 = vunpack.c.l.b16 %v496
          %v577 = vpack.c.b16 %v562, %v561
          %v578 = vpack.c.b16 %v564, %v563
          %v579 = vpack.c.b16 %v566, %v565
          %v580 = vpack.c.b16 %v568, %v567
          %v581 = vpack.c.b16 %v570, %v569
          %v582 = vpack.c.b16 %v572, %v571
          %v583 = vpack.c.b16 %v574, %v573
          %v584 = vpack.c.b16 %v576, %v575
          %593 = vmatpush.bf16.msra.mxu0 %v584
          %594 = vmatpush.bf16.msra.mxu0 %v583
          %595 = vmatpush.bf16.msra.mxu0 %v582
          %596 = vmatpush.bf16.msra.mxu0 %v581
          %597 = vmatpush.bf16.msra.mxu0 %v580
          %598 = vmatpush.bf16.msra.mxu0 %v579
          %599 = vmatpush.bf16.msra.mxu0 %v578
          %600 = vmatpush.bf16.msra.mxu0 %v577
          %601 = vmatmul.bf16.gmra.mxu0 %v529
          %v602 = vpop.f32.mrf.mxu0
          %v603 = vadd.f32 0.0, %v602
          %v604 = vpop.f32.mrf.mxu0
          %v605 = vadd.f32 0.0, %v604
          %606 = vmatmul.bf16.gmra.mxu0 %v530
          %v607 = vpop.f32.mrf.mxu0
          %v608 = vadd.f32 0.0, %v607
          %v609 = vpop.f32.mrf.mxu0
          %v610 = vadd.f32 0.0, %v609
          %611 = vmatmul.bf16.gmra.mxu0 %v531
          %v612 = vpop.f32.mrf.mxu0
          %v613 = vadd.f32 0.0, %v612
          %v614 = vpop.f32.mrf.mxu0
          %v615 = vadd.f32 0.0, %v614
          %616 = vmatmul.bf16.gmra.mxu0 %v532
          %v617 = vpop.f32.mrf.mxu0
          %v618 = vadd.f32 0.0, %v617
          %v619 = vpop.f32.mrf.mxu0
          %v620 = vadd.f32 0.0, %v619
          %621 = vmatmul.bf16.gmra.mxu0 %v533
          %v622 = vpop.f32.mrf.mxu0
          %v623 = vadd.f32 0.0, %v622
          %v624 = vpop.f32.mrf.mxu0
          %v625 = vadd.f32 0.0, %v624
          %626 = vmatmul.bf16.gmra.mxu0 %v534
          %v627 = vpop.f32.mrf.mxu0
          %v628 = vadd.f32 0.0, %v627
          %v629 = vpop.f32.mrf.mxu0
          %v630 = vadd.f32 0.0, %v629
          %631 = vmatmul.bf16.gmra.mxu0 %v535
          %v632 = vpop.f32.mrf.mxu0
          %v633 = vadd.f32 0.0, %v632
          %v634 = vpop.f32.mrf.mxu0
          %v635 = vadd.f32 0.0, %v634
          %636 = vmatmul.bf16.gmra.mxu0 %v536
          %v637 = vpop.f32.mrf.mxu0
          %v638 = vadd.f32 0.0, %v637
          %v639 = vpop.f32.mrf.mxu0
          %v640 = vadd.f32 0.0, %v639
          %641 = vdwg.mxu0
          %v642 = vadd.f32 %v449, %v603
          %v643 = vadd.f32 %v450, %v605
          %v644 = vadd.f32 %v451, %v608
          %v645 = vadd.f32 %v452, %v610
          %v646 = vadd.f32 %v453, %v613
          %v647 = vadd.f32 %v454, %v615
          %v648 = vadd.f32 %v455, %v618
          %v649 = vadd.f32 %v456, %v620
          %v650 = vadd.f32 %v457, %v623
          %v651 = vadd.f32 %v458, %v625
          %v652 = vadd.f32 %v459, %v628
          %v653 = vadd.f32 %v460, %v630
          %v654 = vadd.f32 %v461, %v633
          %v655 = vadd.f32 %v462, %v635
          %v656 = vadd.f32 %v463, %v638
          %v657 = vadd.f32 %v464, %v640
          %658 = vst [vmem:[#allocation2] sm:$0xff] %v642
          %659 = vst [vmem:[#allocation2 + $0x8] sm:$0xff] %v643
          %660 = vst [vmem:[#allocation2 + $0x10] sm:$0xff] %v644
          %661 = vst [vmem:[#allocation2 + $0x18] sm:$0xff] %v645
          %662 = vst [vmem:[#allocation2 + $0x20] sm:$0xff] %v646
          %663 = vst [vmem:[#allocation2 + $0x28] sm:$0xff] %v647
          %664 = vst [vmem:[#allocation2 + $0x30] sm:$0xff] %v648
          %665 = vst [vmem:[#allocation2 + $0x38] sm:$0xff] %v649
          %666 = vst [vmem:[#allocation2 + $0x40] sm:$0xff] %v650
          %667 = vst [vmem:[#allocation2 + $0x48] sm:$0xff] %v651
          %668 = vst [vmem:[#allocation2 + $0x50] sm:$0xff] %v652
          %669 = vst [vmem:[#allocation2 + $0x58] sm:$0xff] %v653
          %670 = vst [vmem:[#allocation2 + $0x60] sm:$0xff] %v654
          %671 = vst [vmem:[#allocation2 + $0x68] sm:$0xff] %v655
          %672 = vst [vmem:[#allocation2 + $0x70] sm:$0xff] %v656
          %673 = vst [vmem:[#allocation2 + $0x78] sm:$0xff] %v657
        $region81: #{_propagate_pool_gather.5} parent=68 // pred_fallthru
          _
        %p674 = scmp.eq.s32.totalorder %s39, 1
        // Predicated region
        $region82: #{_propagate_pool_gather.5} parent=68 // pred_check
          %p675 = pneg %p674
        $region83: #{_propagate_pool_gather.5} parent=68 // pred_check_branch
          %677 = sbr.rel (%p675) target = $region85
        $region84: #{_propagate_pool_gather.5} parent=68 // pred_region
          %v678 = vld [vmem:[#allocation2] sm:$0xff]
          %v679 = vld [vmem:[#allocation2 + $0x8] sm:$0xff]
          %v680 = vld [vmem:[#allocation2 + $0x10] sm:$0xff]
          %v681 = vld [vmem:[#allocation2 + $0x18] sm:$0xff]
          %v682 = vld [vmem:[#allocation2 + $0x20] sm:$0xff]
          %v683 = vld [vmem:[#allocation2 + $0x28] sm:$0xff]
          %v684 = vld [vmem:[#allocation2 + $0x30] sm:$0xff]
          %v685 = vld [vmem:[#allocation2 + $0x38] sm:$0xff]
          %v686 = vld [vmem:[#allocation2 + $0x40] sm:$0xff]
          %v687 = vld [vmem:[#allocation2 + $0x48] sm:$0xff]
          %v688 = vld [vmem:[#allocation2 + $0x50] sm:$0xff]
          %v689 = vld [vmem:[#allocation2 + $0x58] sm:$0xff]
          %v690 = vld [vmem:[#allocation2 + $0x60] sm:$0xff]
          %v691 = vld [vmem:[#allocation2 + $0x68] sm:$0xff]
          %v692 = vld [vmem:[#allocation2 + $0x70] sm:$0xff]
          %v693 = vld [vmem:[#allocation2 + $0x78] sm:$0xff]
          %v694 = vpack.c.bf16 %v678, %v678
          %v695 = vpack.c.bf16 %v679, %v679
          %v696 = vpack.c.bf16 %v680, %v680
          %v697 = vpack.c.bf16 %v681, %v681
          %v698 = vpack.c.bf16 %v682, %v682
          %v699 = vpack.c.bf16 %v683, %v683
          %v700 = vpack.c.bf16 %v684, %v684
          %v701 = vpack.c.bf16 %v685, %v685
          %v702 = vpack.c.bf16 %v686, %v686
          %v703 = vpack.c.bf16 %v687, %v687
          %v704 = vpack.c.bf16 %v688, %v688
          %v705 = vpack.c.bf16 %v689, %v689
          %v706 = vpack.c.bf16 %v690, %v690
          %v707 = vpack.c.bf16 %v691, %v691
          %v708 = vpack.c.bf16 %v692, %v692
          %v709 = vpack.c.bf16 %v693, %v693
          %710 = vst [vmem:[%s387] sm:$0xf] %v694
          %711 = vst [vmem:[%s387 + $0x4] sm:$0xf] %v695
          %712 = vst [vmem:[%s387 + $0x8] sm:$0xf] %v696
          %713 = vst [vmem:[%s387 + $0xc] sm:$0xf] %v697
          %714 = vst [vmem:[%s387 + $0x10] sm:$0xf] %v698
          %715 = vst [vmem:[%s387 + $0x14] sm:$0xf] %v699
          %716 = vst [vmem:[%s387 + $0x18] sm:$0xf] %v700
          %717 = vst [vmem:[%s387 + $0x1c] sm:$0xf] %v701
          %718 = vst [vmem:[%s387 + $0x20] sm:$0xf] %v702
          %719 = vst [vmem:[%s387 + $0x24] sm:$0xf] %v703
          %720 = vst [vmem:[%s387 + $0x28] sm:$0xf] %v704
          %721 = vst [vmem:[%s387 + $0x2c] sm:$0xf] %v705
          %722 = vst [vmem:[%s387 + $0x30] sm:$0xf] %v706
          %723 = vst [vmem:[%s387 + $0x34] sm:$0xf] %v707
          %724 = vst [vmem:[%s387 + $0x38] sm:$0xf] %v708
          %725 = vst [vmem:[%s387 + $0x3c] sm:$0xf] %v709
          %v726 = vld [vmem:[%s415] sm:$0xff]
          %v727 = vld [vmem:[%s415 + $0x8] sm:$0xff]
          %v728 = vld [vmem:[%s415 + $0x10] sm:$0xff]
          %v729 = vld [vmem:[%s415 + $0x18] sm:$0xff]
          %v730 = vld [vmem:[%s415 + $0x20] sm:$0xff]
          %v731 = vld [vmem:[%s415 + $0x28] sm:$0xff]
          %v732 = vld [vmem:[%s415 + $0x30] sm:$0xff]
          %v733 = vld [vmem:[%s415 + $0x38] sm:$0xff]
          %v734 = vld [vmem:[%s415 + $0x40] sm:$0xff]
          %v735 = vld [vmem:[%s415 + $0x48] sm:$0xff]
          %v736 = vld [vmem:[%s415 + $0x50] sm:$0xff]
          %v737 = vld [vmem:[%s415 + $0x58] sm:$0xff]
          %v738 = vld [vmem:[%s415 + $0x60] sm:$0xff]
          %v739 = vld [vmem:[%s415 + $0x68] sm:$0xff]
          %v740 = vld [vmem:[%s415 + $0x70] sm:$0xff]
          %v741 = vld [vmem:[%s415 + $0x78] sm:$0xff]
          %v742 = vadd.f32 %v726, %v678
          %v743 = vadd.f32 %v727, %v679
          %v744 = vadd.f32 %v728, %v680
          %v745 = vadd.f32 %v729, %v681
          %v746 = vadd.f32 %v730, %v682
          %v747 = vadd.f32 %v731, %v683
          %v748 = vadd.f32 %v732, %v684
          %v749 = vadd.f32 %v733, %v685
          %v750 = vadd.f32 %v734, %v686
          %v751 = vadd.f32 %v735, %v687
          %v752 = vadd.f32 %v736, %v688
          %v753 = vadd.f32 %v737, %v689
          %v754 = vadd.f32 %v738, %v690
          %v755 = vadd.f32 %v739, %v691
          %v756 = vadd.f32 %v740, %v692
          %v757 = vadd.f32 %v741, %v693
          %758 = vst [vmem:[%s422] sm:$0xff] %v742
          %759 = vst [vmem:[%s422 + $0x8] sm:$0xff] %v743
          %760 = vst [vmem:[%s422 + $0x10] sm:$0xff] %v744
          %761 = vst [vmem:[%s422 + $0x18] sm:$0xff] %v745
          %762 = vst [vmem:[%s422 + $0x20] sm:$0xff] %v746
          %763 = vst [vmem:[%s422 + $0x28] sm:$0xff] %v747
          %764 = vst [vmem:[%s422 + $0x30] sm:$0xff] %v748
          %765 = vst [vmem:[%s422 + $0x38] sm:$0xff] %v749
          %766 = vst [vmem:[%s422 + $0x40] sm:$0xff] %v750
          %767 = vst [vmem:[%s422 + $0x48] sm:$0xff] %v751
          %768 = vst [vmem:[%s422 + $0x50] sm:$0xff] %v752
          %769 = vst [vmem:[%s422 + $0x58] sm:$0xff] %v753
          %770 = vst [vmem:[%s422 + $0x60] sm:$0xff] %v754
          %771 = vst [vmem:[%s422 + $0x68] sm:$0xff] %v755
          %772 = vst [vmem:[%s422 + $0x70] sm:$0xff] %v756
          %773 = vst [vmem:[%s422 + $0x78] sm:$0xff] %v757
        $region85: #{_propagate_pool_gather.5} parent=68 // pred_fallthru
          _
        %s774 = sand.u32 %s146, 1
        %s775 = scalar_lea.sflag [#allocation8], %s774
        %s776 = sand.u32 %s146, 1
        %s777 = smul.addr %s776, 64
        %s778 = scalar_lea.vmem [#allocation7], %s777
        %s779 = smul.u32 16, %s38
        %p780 = scmp.lt.s32.totalorder %s779, 31
        %s781 = scalar_select %p780, %s779, 31
        %s782 = smul.addr %s781, 8
        %s783 = scalar_lea.vmem %s6, %s782
        // Predicated region
        $region86: #{_propagate_pool_gather.5} parent=68 // pred_check
          %p784 = pneg %p156
        $region87: #{_propagate_pool_gather.5} parent=68 // pred_check_branch
          %786 = sbr.rel (%p784) target = $region89
        $region88: #{_propagate_pool_gather.5} parent=68 // pred_region
          %s787 = smul.u32 16, %s38
          %789 = vsyncadd %s775, 0
          %s790 = smul.addr %s787, 4
          %s791 = scalar_lea.hbm %s5, %s790
          %s792 = sshll.u32 %s778, 4
          %s793 = int_to_ptr.vmem [resolvable:$true] %s792
          %s794 = sshll.u32 %s791, 4
          %s795 = int_to_ptr.hbm [resolvable:$true] %s794
          %800 = dma.vmem_to_hbm [thread:$0]  %s793, 1024, %s795, %s775, 64, 64, 4
        $region89: #{_propagate_pool_gather.5} parent=68 // pred_fallthru
          _
        // Predicated region
        $region90: #{_propagate_pool_gather.5} parent=68 // pred_check
          %p801 = pneg %p182
        $region91: #{_propagate_pool_gather.5} parent=68 // pred_check_branch
          %803 = sbr.rel (%p801) target = $region93
        $region92: #{_propagate_pool_gather.5} parent=68 // pred_region
          %s804 = smul.u32 16, %s38
        $region93: #{_propagate_pool_gather.5} parent=68 // pred_fallthru
          _
      $region69: #{_propagate_pool_gather.5} parent=5 // pred_fallthru
        _
      %p805 = scmp.le.s32.totalorder 2, %s29
      // Predicated region
      $region94: #{_propagate_pool_gather.5} parent=5 // pred_check
        %p806 = pneg %p805
      $region95: #{_propagate_pool_gather.5} parent=5 // pred_check_branch
        %808 = sbr.rel (%p806) target = $region97
      $region96: #{_propagate_pool_gather.5} parent=5 // pred_region
        %s809 = ssub.s32 %s29, 2
        // Predicated region
        $region98: #{_propagate_pool_gather.5} parent=96 // pred_check
          %p810 = pneg %p162
        $region99: #{_propagate_pool_gather.5} parent=96 // pred_check_branch
          %812 = sbr.rel (%p810) target = $region101
        $region100: #{_propagate_pool_gather.5} parent=96 // pred_region
          %s813 = sand.u32 %s147, 1
          %s814 = scalar_lea.sflag [#allocation8], %s813
          %s815 = sand.u32 %s147, 1
          %s816 = smul.addr %s815, 64
          %s817 = scalar_lea.vmem [#allocation7], %s816
          %819 = dma.done %s814, 1024
        $region101: #{_propagate_pool_gather.5} parent=96 // pred_fallthru
          _
        // Predicated region
        $region102: #{_propagate_pool_gather.5} parent=96 // pred_check
          %p820 = pneg %p188
        $region103: #{_propagate_pool_gather.5} parent=96 // pred_check_branch
          %822 = sbr.rel (%p820) target = $region105
        $region104: #{_propagate_pool_gather.5} parent=96 // pred_region
          %s823 = smul.u32 16, %s40
          %p824 = scmp.lt.s32.totalorder %s823, 31
          %s825 = scalar_select %p824, %s823, 31
          %s826 = smul.addr %s825, 8
          %s827 = scalar_lea.vmem %s6, %s826
        $region105: #{_propagate_pool_gather.5} parent=96 // pred_fallthru
          _
      $region97: #{_propagate_pool_gather.5} parent=5 // pred_fallthru
        _
    $region6: #{_propagate_pool_gather.5} parent=1 // loop_footer
      %s33 = sadd.s32 1, %s29
    $region7: #{_propagate_pool_gather.5} parent=1 // loop_footer_branch
      %28 = sbr.rel target = $region3
    $region8: #{_propagate_pool_gather.5} parent=1 // loop_exit
      _
    %828 = vsyncpa [#allocation8], 1
    %s829 = scalar_lea.sflag [#allocation8], 1
    %830 = vsyncpa %s829, 1

// kernel: _propagate_pool_gather.3
$region0: #{_propagate_pool_gather.3}
  #allocation0 [shape = 'u32[]', space=smem, size = 0x4, offset = 0x4, fixed_abs, tag = 'smem constant byte address 0x4 - core index']
  #allocation1 [shape = 'u32[72,128]{1,0:T(1,128)}', space=vmem, size = 0x9000, scoped, tag = 'internal scratch']
  #allocation2 [shape = 'f32[128,128]{1,0:T(8,128)}', space=vmem, size = 0x10000, scoped, tag = 'scratch operand']
  #allocation3 [shape = 's32[1]{0}', space=sflag, size = 0x4, scoped, tag = 'scoped memory for _propagate_pool_gather.3']
  #allocation4 [shape = 'u8[512]{0}', space=smem, size = 0x200, scoped, tag = 'prefetched SMEM operand 0']
  #allocation5 [shape = 'u8[512]{0}', space=smem, size = 0x200, scoped, tag = 'prefetched SMEM operand 1']
  %s0 = inlined_call_operand.vmem [shape: s32[4], index: 0, kind: input, shape index: {}]
  %s1 = inlined_call_operand.vmem [shape: s32[2], index: 1, kind: input, shape index: {}]
  %s2 = inlined_call_operand.vmem [shape: bf16[256,256], index: 2, kind: input, shape index: {}]
  %s3 = inlined_call_operand.vmem [shape: bf16[256,128], index: 3, kind: input, shape index: {}]
  %s4 = inlined_call_operand.vmem [shape: f32[256,128], index: 4, kind: input, shape index: {}, may-alias: {4,6}]
  %s5 = inlined_call_operand.vmem [shape: bf16[256,128], index: 5, kind: output, shape index: {0}]
  %s6 = inlined_call_operand.vmem [shape: f32[256,128], index: 6, kind: output, shape index: {1}, may-alias: {4,6}]
  %7 = xla_tuple %s5, %s6
  %s8 = sld [smem:[#allocation0]]
  $region106: #{_propagate_pool_gather.3} parent=0
    _
  %s10 = ssub.s32 1, %s8
  %s11 = scalar_select 0, %s10, %s8
  %s13 = sshll.u32 %s0, 4
  %s14 = int_to_ptr.vmem [resolvable:$true] %s13
  %16 = dma.vmem_to_smem %s14, 16, [#allocation4], [#allocation3]
  %s18 = sshll.u32 %s1, 4
  %s19 = int_to_ptr.vmem [resolvable:$true] %s18
  %21 = dma.vmem_to_smem %s19, 16, [#allocation5], [#allocation3]
  %23 = dma.done [#allocation3], 32
  %24 = sfence
  $region1: #{_propagate_pool_gather.3} parent=0
    #allocation6 [shape = 'u8[65536]{0}', space=vmem, size = 0x10000, scoped, tag = 'input window, operand 2']
    loop: start=0, step=1, limit=6
    $region2: #{_propagate_pool_gather.3} parent=1 // loop_pre_header
      _
    $region3: #{_propagate_pool_gather.3} parent=1 // loop_header
      %s26 = sphi 0, %s30
      %p27 = scmp.ge.s32.totalorder %s26, 6
      %s33 = sphi 0, %s45
      %s34 = sphi 0, %s41
      %s35 = sphi 0, %s33
      %s36 = sphi 0, %s34
      %s37 = sphi 0, %s35
      %s38 = sphi 0, %s36
      %s56 = sphi 0, %s58
      %s59 = sphi 0, %s56
      %s60 = sphi 0, %s59
      %s76 = sphi 0, %s60
      %s88 = sphi 0, %s90
      %s91 = sphi 0, %s88
      %s92 = sphi 0, %s91
      %s108 = sphi 0, %s92
      %s114 = sphi 0, %s116
      %s117 = sphi 0, %s114
      %s118 = sphi 0, %s117
      %s134 = sphi 0, %s118
      %s140 = sphi 0, %s142
      %s143 = sphi 0, %s140
      %s144 = sphi 0, %s143
      %s160 = sphi 0, %s144
      %s166 = sphi 0, %s168
      %s169 = sphi 0, %s166
      %s170 = sphi 0, %s169
      %s186 = sphi 0, %s170
    $region4: #{_propagate_pool_gather.3} parent=1 // loop_header_branch
      %29 = sbr.rel (%p27) target = $region8
    $region5: #{_propagate_pool_gather.3} parent=1 // loop_body
      %s31 = ssub.s32 %s26, 1
      %s32 = ssub.s32 %s26, 2
      %s39 = sadd.s32 1, %s34
      %p40 = scmp.ge.s32.totalorder %s39, 2
      %s41 = scalar_select %p40, 0, %s39
      %s42 = sadd.s32 1, %s33
      %s43 = scalar_select %p40, %s42, %s33
      %p44 = scmp.ge.s32.totalorder %s43, 2
      %s45 = scalar_select %p44, 0, %s43
      %s46 = smul.u32 %s33, 2
      %s47 = sadd.s32 %s46, %s34
      %s48 = sld [smem:[#allocation4 + %s47]]
      %s49 = smul.u32 %s45, 2
      %s50 = sadd.s32 %s49, %s41
      %s51 = sld [smem:[#allocation4 + %s50]]
      %s52 = ssub.s32 %s33, %s45
      %s53 = ssub.s32 %s48, %s51
      %s54 = sor.u32 %s52, %s53
      %p55 = scmp.eq.s32.totalorder %s54, 0
      %s57 = sadd.s32 %s56, 1
      %s58 = scalar_select %p55, %s56, %s57
      %p61 = pneg %p55
      %p62 = scmp.eq.s32.totalorder %s26, 3
      %p63 = por %p61, %p62
      %p64 = scmp.ne.s32.totalorder %s56, %s59
      %p65 = scmp.eq.s32.totalorder %s26, 0
      %p66 = por %p64, %p65
      %p67 = scmp.ne.s32.totalorder %s56, %s59
      %p68 = scmp.eq.s32.totalorder %s31, 3
      %p69 = por %p67, %p68
      %p70 = scmp.ne.s32.totalorder %s59, %s60
      %p71 = scmp.eq.s32.totalorder %s31, 0
      %p72 = por %p70, %p71
      %p73 = scmp.ne.s32.totalorder %s59, %s60
      %p74 = scmp.eq.s32.totalorder %s32, 3
      %p75 = por %p73, %p74
      %p77 = scmp.ne.s32.totalorder %s60, %s76
      %p78 = scmp.eq.s32.totalorder %s32, 0
      %p79 = por %p77, %p78
      %s80 = smul.u32 %s33, 2
      %s81 = sadd.s32 %s80, %s34
      %s82 = sld [smem:[#allocation4 + %s81]]
      %s83 = smul.u32 %s45, 2
      %s84 = sadd.s32 %s83, %s41
      %s85 = sld [smem:[#allocation4 + %s84]]
      %s86 = ssub.s32 %s82, %s85
      %p87 = scmp.eq.s32.totalorder %s86, 0
      %s89 = sadd.s32 %s88, 1
      %s90 = scalar_select %p87, %s88, %s89
      %p93 = pneg %p87
      %p94 = scmp.eq.s32.totalorder %s26, 3
      %p95 = por %p93, %p94
      %p96 = scmp.ne.s32.totalorder %s88, %s91
      %p97 = scmp.eq.s32.totalorder %s26, 0
      %p98 = por %p96, %p97
      %p99 = scmp.ne.s32.totalorder %s88, %s91
      %p100 = scmp.eq.s32.totalorder %s31, 3
      %p101 = por %p99, %p100
      %p102 = scmp.ne.s32.totalorder %s91, %s92
      %p103 = scmp.eq.s32.totalorder %s31, 0
      %p104 = por %p102, %p103
      %p105 = scmp.ne.s32.totalorder %s91, %s92
      %p106 = scmp.eq.s32.totalorder %s32, 3
      %p107 = por %p105, %p106
      %p109 = scmp.ne.s32.totalorder %s92, %s108
      %p110 = scmp.eq.s32.totalorder %s32, 0
      %p111 = por %p109, %p110
      %s112 = ssub.s32 %s33, %s45
      %p113 = scmp.eq.s32.totalorder %s112, 0
      %s115 = sadd.s32 %s114, 1
      %s116 = scalar_select %p113, %s114, %s115
      %p119 = pneg %p113
      %p120 = scmp.eq.s32.totalorder %s26, 3
      %p121 = por %p119, %p120
      %p122 = scmp.ne.s32.totalorder %s114, %s117
      %p123 = scmp.eq.s32.totalorder %s26, 0
      %p124 = por %p122, %p123
      %p125 = scmp.ne.s32.totalorder %s114, %s117
      %p126 = scmp.eq.s32.totalorder %s31, 3
      %p127 = por %p125, %p126
      %p128 = scmp.ne.s32.totalorder %s117, %s118
      %p129 = scmp.eq.s32.totalorder %s31, 0
      %p130 = por %p128, %p129
      %p131 = scmp.ne.s32.totalorder %s117, %s118
      %p132 = scmp.eq.s32.totalorder %s32, 3
      %p133 = por %p131, %p132
      %p135 = scmp.ne.s32.totalorder %s118, %s134
      %p136 = scmp.eq.s32.totalorder %s32, 0
      %p137 = por %p135, %p136
      %s138 = ssub.s32 %s33, %s45
      %p139 = scmp.eq.s32.totalorder %s138, 0
      %s141 = sadd.s32 %s140, 1
      %s142 = scalar_select %p139, %s140, %s141
      %p145 = pneg %p139
      %p146 = scmp.eq.s32.totalorder %s26, 3
      %p147 = por %p145, %p146
      %p148 = scmp.ne.s32.totalorder %s140, %s143
      %p149 = scmp.eq.s32.totalorder %s26, 0
      %p150 = por %p148, %p149
      %p151 = scmp.ne.s32.totalorder %s140, %s143
      %p152 = scmp.eq.s32.totalorder %s31, 3
      %p153 = por %p151, %p152
      %p154 = scmp.ne.s32.totalorder %s143, %s144
      %p155 = scmp.eq.s32.totalorder %s31, 0
      %p156 = por %p154, %p155
      %p157 = scmp.ne.s32.totalorder %s143, %s144
      %p158 = scmp.eq.s32.totalorder %s32, 3
      %p159 = por %p157, %p158
      %p161 = scmp.ne.s32.totalorder %s144, %s160
      %p162 = scmp.eq.s32.totalorder %s32, 0
      %p163 = por %p161, %p162
      %s164 = ssub.s32 %s33, %s45
      %p165 = scmp.eq.s32.totalorder %s164, 0
      %s167 = sadd.s32 %s166, 1
      %s168 = scalar_select %p165, %s166, %s167
      %p171 = pneg %p165
      %p172 = scmp.eq.s32.totalorder %s26, 3
      %p173 = por %p171, %p172
      %p174 = scmp.ne.s32.totalorder %s166, %s169
      %p175 = scmp.eq.s32.totalorder %s26, 0
      %p176 = por %p174, %p175
      %p177 = scmp.ne.s32.totalorder %s166, %s169
      %p178 = scmp.eq.s32.totalorder %s31, 3
      %p179 = por %p177, %p178
      %p180 = scmp.ne.s32.totalorder %s169, %s170
      %p181 = scmp.eq.s32.totalorder %s31, 0
      %p182 = por %p180, %p181
      %p183 = scmp.ne.s32.totalorder %s169, %s170
      %p184 = scmp.eq.s32.totalorder %s32, 3
      %p185 = por %p183, %p184
      %p187 = scmp.ne.s32.totalorder %s170, %s186
      %p188 = scmp.eq.s32.totalorder %s32, 0
      %p189 = por %p187, %p188
      %p190 = scmp.le.s32.totalorder 1, %s26
      %p191 = scmp.lt.s32.totalorder %s26, 5
      %p192 = pnand %p190, %p191
      %p193 = pneg %p192
      // Predicated region
      $region9: #{_propagate_pool_gather.3} parent=5 // pred_check
        _
      $region10: #{_propagate_pool_gather.3} parent=5 // pred_check_branch
        %195 = sbr.rel (%p192) target = $region12
      $region11: #{_propagate_pool_gather.3} parent=5 // pred_region
        %s196 = ssub.s32 %s26, 1
      $region12: #{_propagate_pool_gather.3} parent=5 // pred_fallthru
        _
      %p197 = scmp.lt.s32.totalorder %s26, 4
      // Predicated region
      $region13: #{_propagate_pool_gather.3} parent=5 // pred_check
        %p198 = pneg %p197
      $region14: #{_propagate_pool_gather.3} parent=5 // pred_check_branch
        %200 = sbr.rel (%p198) target = $region16
      $region15: #{_propagate_pool_gather.3} parent=5 // pred_region
        // Predicated region
        $region17: #{_propagate_pool_gather.3} parent=15 // pred_check
          %p201 = pneg %p66
        $region18: #{_propagate_pool_gather.3} parent=15 // pred_check_branch
          %203 = sbr.rel (%p201) target = $region20
        $region19: #{_propagate_pool_gather.3} parent=15 // pred_region
          %s204 = sand.u32 %s56, 1
          %s205 = sand.u32 %s56, 1
          %s206 = smul.addr %s205, 64
          %s207 = scalar_lea.vmem [#allocation6], %s206
          %s208 = smul.u32 %s33, 2
          %s209 = sadd.s32 %s208, %s34
          %s210 = sld [smem:[#allocation4 + %s209]]
          %s211 = smul.u32 16, %s33
          %s212 = smul.addr %s211, 2
          %s213 = sadd.s32 %s210, %s212
          %s214 = smul.addr %s213, 4
          %s215 = scalar_lea.vmem %s2, %s214
          // Predicated region
          $region21: #{_propagate_pool_gather.3} parent=19 // pred_check
            _
          $region22: #{_propagate_pool_gather.3} parent=19 // pred_check_branch
            %217 = sbr.rel (0) target = $region24
          $region23: #{_propagate_pool_gather.3} parent=19 // pred_region
            // Predicated region
            $region25: #{_propagate_pool_gather.3} parent=23 // pred_check
              _
            $region26: #{_propagate_pool_gather.3} parent=23 // pred_check_branch
              %219 = sbr.rel target = $region28
            $region27: #{_propagate_pool_gather.3} parent=23 // pred_region
              // Predicated region
              $region40: #{_propagate_pool_gather.3} parent=27 // pred_check
                _
              $region41: #{_propagate_pool_gather.3} parent=27 // pred_check_branch
                %265 = sbr.rel (0) target = $region43
              $region42: #{_propagate_pool_gather.3} parent=27 // pred_region
                loop: start=0, step=1, limit=1
                $region44: #{_propagate_pool_gather.3} parent=42 // loop_pre_header
                  _
                $region45: #{_propagate_pool_gather.3} parent=42 // loop_header
                  %s267 = sphi 0, %s271
                  %p268 = scmp.ge.s32.totalorder %s267, 1
                  %s272 = sphi %s215, %s215
                  %s273 = sphi %s207, %s207
                $region46: #{_propagate_pool_gather.3} parent=42 // loop_header_branch
                  %270 = sbr.rel (%p268) target = $region50
                $region47: #{_propagate_pool_gather.3} parent=42 // loop_body
                  _
                $region48: #{_propagate_pool_gather.3} parent=42 // loop_footer
                  %s271 = sadd.s32 1, %s267
                $region49: #{_propagate_pool_gather.3} parent=42 // loop_footer_branch
                  %266 = sbr.rel target = $region45
                $region50: #{_propagate_pool_gather.3} parent=42 // loop_exit
                  _
                %s275 = ssub.s32 16, 1
                loop: start=0, step=1, limit=1
                $region51: #{_propagate_pool_gather.3} parent=42 // loop_pre_header
                  _
                $region52: #{_propagate_pool_gather.3} parent=42 // loop_header
                  %s277 = sphi 0, %s281
                  %p278 = scmp.ge.s32.totalorder %s277, 1
                  %s282 = sphi %s215, %s215
                  %s283 = sphi %s207, %s207
                $region53: #{_propagate_pool_gather.3} parent=42 // loop_header_branch
                  %280 = sbr.rel (%p278) target = $region57
                $region54: #{_propagate_pool_gather.3} parent=42 // loop_body
                  %v284 = vld [vmem:[%s282] sm:%s275]
                  %285 = vst [vmem:[%s283] sm:%s275] %v284
                  %v286 = vld [vmem:[%s282 + $0x8] sm:%s275]
                  %287 = vst [vmem:[%s283 + $0x4] sm:%s275] %v286
                  %v288 = vld [vmem:[%s282 + $0x10] sm:%s275]
                  %289 = vst [vmem:[%s283 + $0x8] sm:%s275] %v288
                  %v290 = vld [vmem:[%s282 + $0x18] sm:%s275]
                  %291 = vst [vmem:[%s283 + $0xc] sm:%s275] %v290
                  %v292 = vld [vmem:[%s282 + $0x20] sm:%s275]
                  %293 = vst [vmem:[%s283 + $0x10] sm:%s275] %v292
                  %v294 = vld [vmem:[%s282 + $0x28] sm:%s275]
                  %295 = vst [vmem:[%s283 + $0x14] sm:%s275] %v294
                  %v296 = vld [vmem:[%s282 + $0x30] sm:%s275]
                  %297 = vst [vmem:[%s283 + $0x18] sm:%s275] %v296
                  %v298 = vld [vmem:[%s282 + $0x38] sm:%s275]
                  %299 = vst [vmem:[%s283 + $0x1c] sm:%s275] %v298
                  %v300 = vld [vmem:[%s282 + $0x40] sm:%s275]
                  %301 = vst [vmem:[%s283 + $0x20] sm:%s275] %v300
                  %v302 = vld [vmem:[%s282 + $0x48] sm:%s275]
                  %303 = vst [vmem:[%s283 + $0x24] sm:%s275] %v302
                  %v304 = vld [vmem:[%s282 + $0x50] sm:%s275]
                  %305 = vst [vmem:[%s283 + $0x28] sm:%s275] %v304
                  %v306 = vld [vmem:[%s282 + $0x58] sm:%s275]
                  %307 = vst [vmem:[%s283 + $0x2c] sm:%s275] %v306
                  %v308 = vld [vmem:[%s282 + $0x60] sm:%s275]
                  %309 = vst [vmem:[%s283 + $0x30] sm:%s275] %v308
                  %v310 = vld [vmem:[%s282 + $0x68] sm:%s275]
                  %311 = vst [vmem:[%s283 + $0x34] sm:%s275] %v310
                  %v312 = vld [vmem:[%s282 + $0x70] sm:%s275]
                  %313 = vst [vmem:[%s283 + $0x38] sm:%s275] %v312
                  %v314 = vld [vmem:[%s282 + $0x78] sm:%s275]
                  %315 = vst [vmem:[%s283 + $0x3c] sm:%s275] %v314
                $region55: #{_propagate_pool_gather.3} parent=42 // loop_footer
                  %s281 = sadd.s32 1, %s277
                $region56: #{_propagate_pool_gather.3} parent=42 // loop_footer_branch
                  %276 = sbr.rel target = $region52
                $region57: #{_propagate_pool_gather.3} parent=42 // loop_exit
                  _
              $region43: #{_propagate_pool_gather.3} parent=27 // pred_fallthru
                _
            $region28: #{_propagate_pool_gather.3} parent=23 // pred_fallthru
              _
            // Predicated region
            $region29: #{_propagate_pool_gather.3} parent=23 // pred_check
              _
            $region30: #{_propagate_pool_gather.3} parent=23 // pred_check_branch
              %221 = sbr.rel (0) target = $region32
            $region31: #{_propagate_pool_gather.3} parent=23 // pred_region
              %s223 = ssub.s32 16, 1
              loop: start=0, step=1, limit=1
              $region33: #{_propagate_pool_gather.3} parent=31 // loop_pre_header
                _
              $region34: #{_propagate_pool_gather.3} parent=31 // loop_header
                %s225 = sphi 0, %s229
                %p226 = scmp.ge.s32.totalorder %s225, 1
                %s230 = sphi %s215, %s215
                %s231 = sphi %s207, %s207
              $region35: #{_propagate_pool_gather.3} parent=31 // loop_header_branch
                %228 = sbr.rel (%p226) target = $region39
              $region36: #{_propagate_pool_gather.3} parent=31 // loop_body
                %v232 = vld [vmem:[%s230] sm:%s223]
                %233 = vst [vmem:[%s231] sm:%s223] %v232
                %v234 = vld [vmem:[%s230 + $0x8] sm:%s223]
                %235 = vst [vmem:[%s231 + $0x4] sm:%s223] %v234
                %v236 = vld [vmem:[%s230 + $0x10] sm:%s223]
                %237 = vst [vmem:[%s231 + $0x8] sm:%s223] %v236
                %v238 = vld [vmem:[%s230 + $0x18] sm:%s223]
                %239 = vst [vmem:[%s231 + $0xc] sm:%s223] %v238
                %v240 = vld [vmem:[%s230 + $0x20] sm:%s223]
                %241 = vst [vmem:[%s231 + $0x10] sm:%s223] %v240
                %v242 = vld [vmem:[%s230 + $0x28] sm:%s223]
                %243 = vst [vmem:[%s231 + $0x14] sm:%s223] %v242
                %v244 = vld [vmem:[%s230 + $0x30] sm:%s223]
                %245 = vst [vmem:[%s231 + $0x18] sm:%s223] %v244
                %v246 = vld [vmem:[%s230 + $0x38] sm:%s223]
                %247 = vst [vmem:[%s231 + $0x1c] sm:%s223] %v246
                %v248 = vld [vmem:[%s230 + $0x40] sm:%s223]
                %249 = vst [vmem:[%s231 + $0x20] sm:%s223] %v248
                %v250 = vld [vmem:[%s230 + $0x48] sm:%s223]
                %251 = vst [vmem:[%s231 + $0x24] sm:%s223] %v250
                %v252 = vld [vmem:[%s230 + $0x50] sm:%s223]
                %253 = vst [vmem:[%s231 + $0x28] sm:%s223] %v252
                %v254 = vld [vmem:[%s230 + $0x58] sm:%s223]
                %255 = vst [vmem:[%s231 + $0x2c] sm:%s223] %v254
                %v256 = vld [vmem:[%s230 + $0x60] sm:%s223]
                %257 = vst [vmem:[%s231 + $0x30] sm:%s223] %v256
                %v258 = vld [vmem:[%s230 + $0x68] sm:%s223]
                %259 = vst [vmem:[%s231 + $0x34] sm:%s223] %v258
                %v260 = vld [vmem:[%s230 + $0x70] sm:%s223]
                %261 = vst [vmem:[%s231 + $0x38] sm:%s223] %v260
                %v262 = vld [vmem:[%s230 + $0x78] sm:%s223]
                %263 = vst [vmem:[%s231 + $0x3c] sm:%s223] %v262
              $region37: #{_propagate_pool_gather.3} parent=31 // loop_footer
                %s229 = sadd.s32 1, %s225
              $region38: #{_propagate_pool_gather.3} parent=31 // loop_footer_branch
                %224 = sbr.rel target = $region34
              $region39: #{_propagate_pool_gather.3} parent=31 // loop_exit
                _
            $region32: #{_propagate_pool_gather.3} parent=23 // pred_fallthru
              _
          $region24: #{_propagate_pool_gather.3} parent=19 // pred_fallthru
            _
          %316 = vnop
        $region20: #{_propagate_pool_gather.3} parent=15 // pred_fallthru
          _
        // Predicated region
        $region58: #{_propagate_pool_gather.3} parent=15 // pred_check
          %p317 = pneg %p98
        $region59: #{_propagate_pool_gather.3} parent=15 // pred_check_branch
          %319 = sbr.rel (%p317) target = $region61
        $region60: #{_propagate_pool_gather.3} parent=15 // pred_region
          %s320 = smul.u32 %s33, 2
          %s321 = sadd.s32 %s320, %s34
          %s322 = sld [smem:[#allocation4 + %s321]]
          %s323 = smul.u32 16, %s322
          %p324 = scmp.lt.s32.totalorder %s323, 31
          %s325 = scalar_select %p324, %s323, 31
          %s326 = smul.addr %s325, 4
          %s327 = scalar_lea.vmem %s3, %s326
          %s328 = smul.u32 %s33, 2
          %s329 = sadd.s32 %s328, %s34
          %s330 = sld [smem:[#allocation4 + %s329]]
          %s331 = smul.u32 16, %s330
        $region61: #{_propagate_pool_gather.3} parent=15 // pred_fallthru
          _
        // Predicated region
        $region62: #{_propagate_pool_gather.3} parent=15 // pred_check
          %p332 = pneg %p124
        $region63: #{_propagate_pool_gather.3} parent=15 // pred_check_branch
          %334 = sbr.rel (%p332) target = $region65
        $region64: #{_propagate_pool_gather.3} parent=15 // pred_region
          %s335 = smul.u32 16, %s33
          %p336 = scmp.lt.s32.totalorder %s335, 31
          %s337 = scalar_select %p336, %s335, 31
          %s338 = smul.addr %s337, 8
          %s339 = scalar_lea.vmem %s4, %s338
          %s340 = smul.u32 16, %s33
        $region65: #{_propagate_pool_gather.3} parent=15 // pred_fallthru
          _
      $region16: #{_propagate_pool_gather.3} parent=5 // pred_fallthru
        _
      %p341 = scmp.le.s32.totalorder 1, %s26
      %p342 = scmp.lt.s32.totalorder %s26, 5
      %p343 = pnand %p341, %p342
      %p344 = pneg %p343
      // Predicated region
      $region66: #{_propagate_pool_gather.3} parent=5 // pred_check
        _
      $region67: #{_propagate_pool_gather.3} parent=5 // pred_check_branch
        %346 = sbr.rel (%p343) target = $region69
      $region68: #{_propagate_pool_gather.3} parent=5 // pred_region
        %s347 = ssub.s32 %s26, 1
        %s348 = sand.u32 %s59, 1
        %s349 = sand.u32 %s59, 1
        %s350 = smul.addr %s349, 64
        %s351 = scalar_lea.vmem [#allocation6], %s350
        // Predicated region
        $region70: #{_propagate_pool_gather.3} parent=68 // pred_check
          %p352 = pneg %p72
        $region71: #{_propagate_pool_gather.3} parent=68 // pred_check_branch
          %354 = sbr.rel (%p352) target = $region73
        $region72: #{_propagate_pool_gather.3} parent=68 // pred_region
          _
        $region73: #{_propagate_pool_gather.3} parent=68 // pred_fallthru
          _
        %s355 = sand.u32 %s59, 1
        %s356 = sand.u32 %s59, 1
        %s357 = smul.addr %s356, 64
        %s358 = scalar_lea.vmem [#allocation6], %s357
        %p359 = pneg %p72
        %p360 = pneg %p69
        %s361 = smul.u32 %s35, 2
        %s362 = sadd.s32 %s361, %s36
        %s363 = sld [smem:[#allocation4 + %s362]]
        %s364 = smul.u32 16, %s363
        %p365 = scmp.lt.s32.totalorder %s364, 31
        %s366 = scalar_select %p365, %s364, 31
        %s367 = smul.addr %s366, 4
        %s368 = scalar_lea.vmem %s3, %s367
        %p369 = pneg %p104
        %p370 = pneg %p101
        %s371 = smul.u32 16, %s35
        %p372 = scmp.lt.s32.totalorder %s371, 31
        %s373 = scalar_select %p372, %s371, 31
        %s374 = smul.addr %s373, 8
        %s375 = scalar_lea.vmem %s4, %s374
        %p376 = pneg %p130
        %p377 = pneg %p127
        %p378 = pneg %p156
        %p379 = pneg %p153
        %s380 = smul.u32 16, %s35
        %p381 = scmp.lt.s32.totalorder %s380, 31
        %s382 = scalar_select %p381, %s380, 31
        %s383 = smul.addr %s382, 4
        %s384 = scalar_lea.vmem %s5, %s383
        %p385 = pneg %p182
        %p386 = pneg %p179
        %s387 = smul.u32 16, %s35
        %p388 = scmp.lt.s32.totalorder %s387, 31
        %s389 = scalar_select %p388, %s387, 31
        %s390 = smul.addr %s389, 8
        %s391 = scalar_lea.vmem %s6, %s390
        %s392 = smul.u32 %s35, 2
        %s393 = sadd.s32 %s392, %s36
        %s394 = sld [smem:[#allocation4 + %s393]]
        %s395 = smul.u32 16, %s35
        %s396 = smul.u32 %s35, 2
        %s397 = sadd.s32 %s396, %s36
        %s398 = sld [smem:[#allocation4 + %s397]]
        %s399 = smul.u32 16, %s398
        %p400 = scmp.lt.s32.totalorder %s399, 31
        %s401 = scalar_select %p400, %s399, 31
        %s402 = smul.addr %s401, 4
        %s403 = scalar_lea.vmem %s3, %s402
        %s404 = smul.u32 %s35, 2
        %s405 = sadd.s32 %s404, %s36
        %s406 = sld [smem:[#allocation4 + %s405]]
        %s407 = smul.u32 16, %s406
        %s408 = smul.u32 16, %s35
        %p409 = scmp.lt.s32.totalorder %s408, 31
        %s410 = scalar_select %p409, %s408, 31
        %s411 = smul.addr %s410, 8
        %s412 = scalar_lea.vmem %s4, %s411
        %s413 = smul.u32 16, %s35
        %s414 = smul.u32 16, %s35
        %p415 = scmp.lt.s32.totalorder %s414, 31
        %s416 = scalar_select %p415, %s414, 31
        %s417 = smul.addr %s416, 4
        %s418 = scalar_lea.vmem %s5, %s417
        %s419 = smul.u32 16, %s35
        %s420 = smul.u32 16, %s35
        %p421 = scmp.lt.s32.totalorder %s420, 31
        %s422 = scalar_select %p421, %s420, 31
        %s423 = smul.addr %s422, 8
        %s424 = scalar_lea.vmem %s6, %s423
        %s425 = smul.u32 16, %s35
        %p426 = scmp.eq.s32.totalorder %s36, 0
        // Predicated region
        $region74: #{_propagate_pool_gather.3} parent=68 // pred_check
          %p427 = pneg %p426
        $region75: #{_propagate_pool_gather.3} parent=68 // pred_check_branch
          %429 = sbr.rel (%p427) target = $region77
        $region76: #{_propagate_pool_gather.3} parent=68 // pred_region
          %430 = vst [vmem:[#allocation2] sm:$0xff] 0.0
          %431 = vst [vmem:[#allocation2 + $0x8] sm:$0xff] 0.0
          %432 = vst [vmem:[#allocation2 + $0x10] sm:$0xff] 0.0
          %433 = vst [vmem:[#allocation2 + $0x18] sm:$0xff] 0.0
          %434 = vst [vmem:[#allocation2 + $0x20] sm:$0xff] 0.0
          %435 = vst [vmem:[#allocation2 + $0x28] sm:$0xff] 0.0
          %436 = vst [vmem:[#allocation2 + $0x30] sm:$0xff] 0.0
          %437 = vst [vmem:[#allocation2 + $0x38] sm:$0xff] 0.0
          %438 = vst [vmem:[#allocation2 + $0x40] sm:$0xff] 0.0
          %439 = vst [vmem:[#allocation2 + $0x48] sm:$0xff] 0.0
          %440 = vst [vmem:[#allocation2 + $0x50] sm:$0xff] 0.0
          %441 = vst [vmem:[#allocation2 + $0x58] sm:$0xff] 0.0
          %442 = vst [vmem:[#allocation2 + $0x60] sm:$0xff] 0.0
          %443 = vst [vmem:[#allocation2 + $0x68] sm:$0xff] 0.0
          %444 = vst [vmem:[#allocation2 + $0x70] sm:$0xff] 0.0
          %445 = vst [vmem:[#allocation2 + $0x78] sm:$0xff] 0.0
        $region77: #{_propagate_pool_gather.3} parent=68 // pred_fallthru
          _
        %s446 = sld [smem:[#allocation5 + %s35]]
        %p447 = scmp.lt.s32.totalorder %s36, %s446
        // Predicated region
        $region78: #{_propagate_pool_gather.3} parent=68 // pred_check
          %p448 = pneg %p447
        $region79: #{_propagate_pool_gather.3} parent=68 // pred_check_branch
          %450 = sbr.rel (%p448) target = $region81
        $region80: #{_propagate_pool_gather.3} parent=68 // pred_region
          %v451 = vld [vmem:[#allocation2] sm:$0xff]
          %v452 = vld [vmem:[#allocation2 + $0x8] sm:$0xff]
          %v453 = vld [vmem:[#allocation2 + $0x10] sm:$0xff]
          %v454 = vld [vmem:[#allocation2 + $0x18] sm:$0xff]
          %v455 = vld [vmem:[#allocation2 + $0x20] sm:$0xff]
          %v456 = vld [vmem:[#allocation2 + $0x28] sm:$0xff]
          %v457 = vld [vmem:[#allocation2 + $0x30] sm:$0xff]
          %v458 = vld [vmem:[#allocation2 + $0x38] sm:$0xff]
          %v459 = vld [vmem:[#allocation2 + $0x40] sm:$0xff]
          %v460 = vld [vmem:[#allocation2 + $0x48] sm:$0xff]
          %v461 = vld [vmem:[#allocation2 + $0x50] sm:$0xff]
          %v462 = vld [vmem:[#allocation2 + $0x58] sm:$0xff]
          %v463 = vld [vmem:[#allocation2 + $0x60] sm:$0xff]
          %v464 = vld [vmem:[#allocation2 + $0x68] sm:$0xff]
          %v465 = vld [vmem:[#allocation2 + $0x70] sm:$0xff]
          %v466 = vld [vmem:[#allocation2 + $0x78] sm:$0xff]
          %v467 = vld [vmem:[%s351] sm:$0xf]
          %v468 = vld [vmem:[%s351 + $0x4] sm:$0xf]
          %v469 = vld [vmem:[%s351 + $0x8] sm:$0xf]
          %v470 = vld [vmem:[%s351 + $0xc] sm:$0xf]
          %v471 = vld [vmem:[%s351 + $0x10] sm:$0xf]
          %v472 = vld [vmem:[%s351 + $0x14] sm:$0xf]
          %v473 = vld [vmem:[%s351 + $0x18] sm:$0xf]
          %v474 = vld [vmem:[%s351 + $0x1c] sm:$0xf]
          %v475 = vld [vmem:[%s351 + $0x20] sm:$0xf]
          %v476 = vld [vmem:[%s351 + $0x24] sm:$0xf]
          %v477 = vld [vmem:[%s351 + $0x28] sm:$0xf]
          %v478 = vld [vmem:[%s351 + $0x2c] sm:$0xf]
          %v479 = vld [vmem:[%s351 + $0x30] sm:$0xf]
          %v480 = vld [vmem:[%s351 + $0x34] sm:$0xf]
          %v481 = vld [vmem:[%s351 + $0x38] sm:$0xf]
          %v482 = vld [vmem:[%s351 + $0x3c] sm:$0xf]
          %v483 = vld [vmem:[%s403] sm:$0xf]
          %v484 = vld [vmem:[%s403 + $0x4] sm:$0xf]
          %v485 = vld [vmem:[%s403 + $0x8] sm:$0xf]
          %v486 = vld [vmem:[%s403 + $0xc] sm:$0xf]
          %v487 = vld [vmem:[%s403 + $0x10] sm:$0xf]
          %v488 = vld [vmem:[%s403 + $0x14] sm:$0xf]
          %v489 = vld [vmem:[%s403 + $0x18] sm:$0xf]
          %v490 = vld [vmem:[%s403 + $0x1c] sm:$0xf]
          %v491 = vld [vmem:[%s403 + $0x20] sm:$0xf]
          %v492 = vld [vmem:[%s403 + $0x24] sm:$0xf]
          %v493 = vld [vmem:[%s403 + $0x28] sm:$0xf]
          %v494 = vld [vmem:[%s403 + $0x2c] sm:$0xf]
          %v495 = vld [vmem:[%s403 + $0x30] sm:$0xf]
          %v496 = vld [vmem:[%s403 + $0x34] sm:$0xf]
          %v497 = vld [vmem:[%s403 + $0x38] sm:$0xf]
          %v498 = vld [vmem:[%s403 + $0x3c] sm:$0xf]
          %v515 = vunpack.c.l.b16 %v467
          %v516 = vunpack.c.l.b16 %v468
          %v517 = vunpack.c.l.b16 %v469
          %v518 = vunpack.c.l.b16 %v470
          %v519 = vunpack.c.l.b16 %v471
          %v520 = vunpack.c.l.b16 %v472
          %v521 = vunpack.c.l.b16 %v473
          %v522 = vunpack.c.l.b16 %v474
          %v523 = vunpack.c.l.b16 %v475
          %v524 = vunpack.c.l.b16 %v476
          %v525 = vunpack.c.l.b16 %v477
          %v526 = vunpack.c.l.b16 %v478
          %v527 = vunpack.c.l.b16 %v479
          %v528 = vunpack.c.l.b16 %v480
          %v529 = vunpack.c.l.b16 %v481
          %v530 = vunpack.c.l.b16 %v482
          %v531 = vpack.c.b16 %v516, %v515
          %v532 = vpack.c.b16 %v518, %v517
          %v533 = vpack.c.b16 %v520, %v519
          %v534 = vpack.c.b16 %v522, %v521
          %v535 = vpack.c.b16 %v524, %v523
          %v536 = vpack.c.b16 %v526, %v525
          %v537 = vpack.c.b16 %v528, %v527
          %v538 = vpack.c.b16 %v530, %v529
          %v563 = vunpack.c.l.b16 %v483
          %v564 = vunpack.c.l.b16 %v484
          %v565 = vunpack.c.l.b16 %v485
          %v566 = vunpack.c.l.b16 %v486
          %v567 = vunpack.c.l.b16 %v487
          %v568 = vunpack.c.l.b16 %v488
          %v569 = vunpack.c.l.b16 %v489
          %v570 = vunpack.c.l.b16 %v490
          %v571 = vunpack.c.l.b16 %v491
          %v572 = vunpack.c.l.b16 %v492
          %v573 = vunpack.c.l.b16 %v493
          %v574 = vunpack.c.l.b16 %v494
          %v575 = vunpack.c.l.b16 %v495
          %v576 = vunpack.c.l.b16 %v496
          %v577 = vunpack.c.l.b16 %v497
          %v578 = vunpack.c.l.b16 %v498
          %v579 = vpack.c.b16 %v564, %v563
          %v580 = vpack.c.b16 %v566, %v565
          %v581 = vpack.c.b16 %v568, %v567
          %v582 = vpack.c.b16 %v570, %v569
          %v583 = vpack.c.b16 %v572, %v571
          %v584 = vpack.c.b16 %v574, %v573
          %v585 = vpack.c.b16 %v576, %v575
          %v586 = vpack.c.b16 %v578, %v577
          %595 = vmatpush.bf16.msra.mxu0 %v586
          %596 = vmatpush.bf16.msra.mxu0 %v585
          %597 = vmatpush.bf16.msra.mxu0 %v584
          %598 = vmatpush.bf16.msra.mxu0 %v583
          %599 = vmatpush.bf16.msra.mxu0 %v582
          %600 = vmatpush.bf16.msra.mxu0 %v581
          %601 = vmatpush.bf16.msra.mxu0 %v580
          %602 = vmatpush.bf16.msra.mxu0 %v579
          %603 = vmatmul.bf16.gmra.mxu0 %v531
          %v604 = vpop.f32.mrf.mxu0
          %v605 = vadd.f32 0.0, %v604
          %v606 = vpop.f32.mrf.mxu0
          %v607 = vadd.f32 0.0, %v606
          %608 = vmatmul.bf16.gmra.mxu0 %v532
          %v609 = vpop.f32.mrf.mxu0
          %v610 = vadd.f32 0.0, %v609
          %v611 = vpop.f32.mrf.mxu0
          %v612 = vadd.f32 0.0, %v611
          %613 = vmatmul.bf16.gmra.mxu0 %v533
          %v614 = vpop.f32.mrf.mxu0
          %v615 = vadd.f32 0.0, %v614
          %v616 = vpop.f32.mrf.mxu0
          %v617 = vadd.f32 0.0, %v616
          %618 = vmatmul.bf16.gmra.mxu0 %v534
          %v619 = vpop.f32.mrf.mxu0
          %v620 = vadd.f32 0.0, %v619
          %v621 = vpop.f32.mrf.mxu0
          %v622 = vadd.f32 0.0, %v621
          %623 = vmatmul.bf16.gmra.mxu0 %v535
          %v624 = vpop.f32.mrf.mxu0
          %v625 = vadd.f32 0.0, %v624
          %v626 = vpop.f32.mrf.mxu0
          %v627 = vadd.f32 0.0, %v626
          %628 = vmatmul.bf16.gmra.mxu0 %v536
          %v629 = vpop.f32.mrf.mxu0
          %v630 = vadd.f32 0.0, %v629
          %v631 = vpop.f32.mrf.mxu0
          %v632 = vadd.f32 0.0, %v631
          %633 = vmatmul.bf16.gmra.mxu0 %v537
          %v634 = vpop.f32.mrf.mxu0
          %v635 = vadd.f32 0.0, %v634
          %v636 = vpop.f32.mrf.mxu0
          %v637 = vadd.f32 0.0, %v636
          %638 = vmatmul.bf16.gmra.mxu0 %v538
          %v639 = vpop.f32.mrf.mxu0
          %v640 = vadd.f32 0.0, %v639
          %v641 = vpop.f32.mrf.mxu0
          %v642 = vadd.f32 0.0, %v641
          %643 = vdwg.mxu0
          %v644 = vadd.f32 %v451, %v605
          %v645 = vadd.f32 %v452, %v607
          %v646 = vadd.f32 %v453, %v610
          %v647 = vadd.f32 %v454, %v612
          %v648 = vadd.f32 %v455, %v615
          %v649 = vadd.f32 %v456, %v617
          %v650 = vadd.f32 %v457, %v620
          %v651 = vadd.f32 %v458, %v622
          %v652 = vadd.f32 %v459, %v625
          %v653 = vadd.f32 %v460, %v627
          %v654 = vadd.f32 %v461, %v630
          %v655 = vadd.f32 %v462, %v632
          %v656 = vadd.f32 %v463, %v635
          %v657 = vadd.f32 %v464, %v637
          %v658 = vadd.f32 %v465, %v640
          %v659 = vadd.f32 %v466, %v642
          %660 = vst [vmem:[#allocation2] sm:$0xff] %v644
          %661 = vst [vmem:[#allocation2 + $0x8] sm:$0xff] %v645
          %662 = vst [vmem:[#allocation2 + $0x10] sm:$0xff] %v646
          %663 = vst [vmem:[#allocation2 + $0x18] sm:$0xff] %v647
          %664 = vst [vmem:[#allocation2 + $0x20] sm:$0xff] %v648
          %665 = vst [vmem:[#allocation2 + $0x28] sm:$0xff] %v649
          %666 = vst [vmem:[#allocation2 + $0x30] sm:$0xff] %v650
          %667 = vst [vmem:[#allocation2 + $0x38] sm:$0xff] %v651
          %668 = vst [vmem:[#allocation2 + $0x40] sm:$0xff] %v652
          %669 = vst [vmem:[#allocation2 + $0x48] sm:$0xff] %v653
          %670 = vst [vmem:[#allocation2 + $0x50] sm:$0xff] %v654
          %671 = vst [vmem:[#allocation2 + $0x58] sm:$0xff] %v655
          %672 = vst [vmem:[#allocation2 + $0x60] sm:$0xff] %v656
          %673 = vst [vmem:[#allocation2 + $0x68] sm:$0xff] %v657
          %674 = vst [vmem:[#allocation2 + $0x70] sm:$0xff] %v658
          %675 = vst [vmem:[#allocation2 + $0x78] sm:$0xff] %v659
        $region81: #{_propagate_pool_gather.3} parent=68 // pred_fallthru
          _
        %p676 = scmp.eq.s32.totalorder %s36, 1
        // Predicated region
        $region82: #{_propagate_pool_gather.3} parent=68 // pred_check
          %p677 = pneg %p676
        $region83: #{_propagate_pool_gather.3} parent=68 // pred_check_branch
          %679 = sbr.rel (%p677) target = $region85
        $region84: #{_propagate_pool_gather.3} parent=68 // pred_region
          %v680 = vld [vmem:[#allocation2] sm:$0xff]
          %v681 = vld [vmem:[#allocation2 + $0x8] sm:$0xff]
          %v682 = vld [vmem:[#allocation2 + $0x10] sm:$0xff]
          %v683 = vld [vmem:[#allocation2 + $0x18] sm:$0xff]
          %v684 = vld [vmem:[#allocation2 + $0x20] sm:$0xff]
          %v685 = vld [vmem:[#allocation2 + $0x28] sm:$0xff]
          %v686 = vld [vmem:[#allocation2 + $0x30] sm:$0xff]
          %v687 = vld [vmem:[#allocation2 + $0x38] sm:$0xff]
          %v688 = vld [vmem:[#allocation2 + $0x40] sm:$0xff]
          %v689 = vld [vmem:[#allocation2 + $0x48] sm:$0xff]
          %v690 = vld [vmem:[#allocation2 + $0x50] sm:$0xff]
          %v691 = vld [vmem:[#allocation2 + $0x58] sm:$0xff]
          %v692 = vld [vmem:[#allocation2 + $0x60] sm:$0xff]
          %v693 = vld [vmem:[#allocation2 + $0x68] sm:$0xff]
          %v694 = vld [vmem:[#allocation2 + $0x70] sm:$0xff]
          %v695 = vld [vmem:[#allocation2 + $0x78] sm:$0xff]
          %v696 = vpack.c.bf16 %v680, %v680
          %v697 = vpack.c.bf16 %v681, %v681
          %v698 = vpack.c.bf16 %v682, %v682
          %v699 = vpack.c.bf16 %v683, %v683
          %v700 = vpack.c.bf16 %v684, %v684
          %v701 = vpack.c.bf16 %v685, %v685
          %v702 = vpack.c.bf16 %v686, %v686
          %v703 = vpack.c.bf16 %v687, %v687
          %v704 = vpack.c.bf16 %v688, %v688
          %v705 = vpack.c.bf16 %v689, %v689
          %v706 = vpack.c.bf16 %v690, %v690
          %v707 = vpack.c.bf16 %v691, %v691
          %v708 = vpack.c.bf16 %v692, %v692
          %v709 = vpack.c.bf16 %v693, %v693
          %v710 = vpack.c.bf16 %v694, %v694
          %v711 = vpack.c.bf16 %v695, %v695
          %712 = vst [vmem:[%s418] sm:$0xf] %v696
          %713 = vst [vmem:[%s418 + $0x4] sm:$0xf] %v697
          %714 = vst [vmem:[%s418 + $0x8] sm:$0xf] %v698
          %715 = vst [vmem:[%s418 + $0xc] sm:$0xf] %v699
          %716 = vst [vmem:[%s418 + $0x10] sm:$0xf] %v700
          %717 = vst [vmem:[%s418 + $0x14] sm:$0xf] %v701
          %718 = vst [vmem:[%s418 + $0x18] sm:$0xf] %v702
          %719 = vst [vmem:[%s418 + $0x1c] sm:$0xf] %v703
          %720 = vst [vmem:[%s418 + $0x20] sm:$0xf] %v704
          %721 = vst [vmem:[%s418 + $0x24] sm:$0xf] %v705
          %722 = vst [vmem:[%s418 + $0x28] sm:$0xf] %v706
          %723 = vst [vmem:[%s418 + $0x2c] sm:$0xf] %v707
          %724 = vst [vmem:[%s418 + $0x30] sm:$0xf] %v708
          %725 = vst [vmem:[%s418 + $0x34] sm:$0xf] %v709
          %726 = vst [vmem:[%s418 + $0x38] sm:$0xf] %v710
          %727 = vst [vmem:[%s418 + $0x3c] sm:$0xf] %v711
          %v728 = vld [vmem:[%s412] sm:$0xff]
          %v729 = vld [vmem:[%s412 + $0x8] sm:$0xff]
          %v730 = vld [vmem:[%s412 + $0x10] sm:$0xff]
          %v731 = vld [vmem:[%s412 + $0x18] sm:$0xff]
          %v732 = vld [vmem:[%s412 + $0x20] sm:$0xff]
          %v733 = vld [vmem:[%s412 + $0x28] sm:$0xff]
          %v734 = vld [vmem:[%s412 + $0x30] sm:$0xff]
          %v735 = vld [vmem:[%s412 + $0x38] sm:$0xff]
          %v736 = vld [vmem:[%s412 + $0x40] sm:$0xff]
          %v737 = vld [vmem:[%s412 + $0x48] sm:$0xff]
          %v738 = vld [vmem:[%s412 + $0x50] sm:$0xff]
          %v739 = vld [vmem:[%s412 + $0x58] sm:$0xff]
          %v740 = vld [vmem:[%s412 + $0x60] sm:$0xff]
          %v741 = vld [vmem:[%s412 + $0x68] sm:$0xff]
          %v742 = vld [vmem:[%s412 + $0x70] sm:$0xff]
          %v743 = vld [vmem:[%s412 + $0x78] sm:$0xff]
          %v744 = vadd.f32 %v728, %v680
          %v745 = vadd.f32 %v729, %v681
          %v746 = vadd.f32 %v730, %v682
          %v747 = vadd.f32 %v731, %v683
          %v748 = vadd.f32 %v732, %v684
          %v749 = vadd.f32 %v733, %v685
          %v750 = vadd.f32 %v734, %v686
          %v751 = vadd.f32 %v735, %v687
          %v752 = vadd.f32 %v736, %v688
          %v753 = vadd.f32 %v737, %v689
          %v754 = vadd.f32 %v738, %v690
          %v755 = vadd.f32 %v739, %v691
          %v756 = vadd.f32 %v740, %v692
          %v757 = vadd.f32 %v741, %v693
          %v758 = vadd.f32 %v742, %v694
          %v759 = vadd.f32 %v743, %v695
          %760 = vst [vmem:[%s424] sm:$0xff] %v744
          %761 = vst [vmem:[%s424 + $0x8] sm:$0xff] %v745
          %762 = vst [vmem:[%s424 + $0x10] sm:$0xff] %v746
          %763 = vst [vmem:[%s424 + $0x18] sm:$0xff] %v747
          %764 = vst [vmem:[%s424 + $0x20] sm:$0xff] %v748
          %765 = vst [vmem:[%s424 + $0x28] sm:$0xff] %v749
          %766 = vst [vmem:[%s424 + $0x30] sm:$0xff] %v750
          %767 = vst [vmem:[%s424 + $0x38] sm:$0xff] %v751
          %768 = vst [vmem:[%s424 + $0x40] sm:$0xff] %v752
          %769 = vst [vmem:[%s424 + $0x48] sm:$0xff] %v753
          %770 = vst [vmem:[%s424 + $0x50] sm:$0xff] %v754
          %771 = vst [vmem:[%s424 + $0x58] sm:$0xff] %v755
          %772 = vst [vmem:[%s424 + $0x60] sm:$0xff] %v756
          %773 = vst [vmem:[%s424 + $0x68] sm:$0xff] %v757
          %774 = vst [vmem:[%s424 + $0x70] sm:$0xff] %v758
          %775 = vst [vmem:[%s424 + $0x78] sm:$0xff] %v759
        $region85: #{_propagate_pool_gather.3} parent=68 // pred_fallthru
          _
        %s776 = smul.u32 16, %s35
        %p777 = scmp.lt.s32.totalorder %s776, 31
        %s778 = scalar_select %p777, %s776, 31
        %s779 = smul.addr %s778, 4
        %s780 = scalar_lea.vmem %s5, %s779
        %s781 = smul.u32 16, %s35
        %p782 = scmp.lt.s32.totalorder %s781, 31
        %s783 = scalar_select %p782, %s781, 31
        %s784 = smul.addr %s783, 8
        %s785 = scalar_lea.vmem %s6, %s784
        // Predicated region
        $region86: #{_propagate_pool_gather.3} parent=68 // pred_check
          %p786 = pneg %p153
        $region87: #{_propagate_pool_gather.3} parent=68 // pred_check_branch
          %788 = sbr.rel (%p786) target = $region89
        $region88: #{_propagate_pool_gather.3} parent=68 // pred_region
          %s789 = smul.u32 16, %s35
        $region89: #{_propagate_pool_gather.3} parent=68 // pred_fallthru
          _
        // Predicated region
        $region90: #{_propagate_pool_gather.3} parent=68 // pred_check
          %p790 = pneg %p179
        $region91: #{_propagate_pool_gather.3} parent=68 // pred_check_branch
          %792 = sbr.rel (%p790) target = $region93
        $region92: #{_propagate_pool_gather.3} parent=68 // pred_region
          %s793 = smul.u32 16, %s35
        $region93: #{_propagate_pool_gather.3} parent=68 // pred_fallthru
          _
      $region69: #{_propagate_pool_gather.3} parent=5 // pred_fallthru
        _
      %p794 = scmp.le.s32.totalorder 2, %s26
      // Predicated region
      $region94: #{_propagate_pool_gather.3} parent=5 // pred_check
        %p795 = pneg %p794
      $region95: #{_propagate_pool_gather.3} parent=5 // pred_check_branch
        %797 = sbr.rel (%p795) target = $region97
      $region96: #{_propagate_pool_gather.3} parent=5 // pred_region
        %s798 = ssub.s32 %s26, 2
        // Predicated region
        $region98: #{_propagate_pool_gather.3} parent=96 // pred_check
          %p799 = pneg %p159
        $region99: #{_propagate_pool_gather.3} parent=96 // pred_check_branch
          %801 = sbr.rel (%p799) target = $region101
        $region100: #{_propagate_pool_gather.3} parent=96 // pred_region
          %s802 = smul.u32 16, %s37
          %p803 = scmp.lt.s32.totalorder %s802, 31
          %s804 = scalar_select %p803, %s802, 31
          %s805 = smul.addr %s804, 4
          %s806 = scalar_lea.vmem %s5, %s805
        $region101: #{_propagate_pool_gather.3} parent=96 // pred_fallthru
          _
        // Predicated region
        $region102: #{_propagate_pool_gather.3} parent=96 // pred_check
          %p807 = pneg %p185
        $region103: #{_propagate_pool_gather.3} parent=96 // pred_check_branch
          %809 = sbr.rel (%p807) target = $region105
        $region104: #{_propagate_pool_gather.3} parent=96 // pred_region
          %s810 = smul.u32 16, %s37
          %p811 = scmp.lt.s32.totalorder %s810, 31
          %s812 = scalar_select %p811, %s810, 31
          %s813 = smul.addr %s812, 8
          %s814 = scalar_lea.vmem %s6, %s813
        $region105: #{_propagate_pool_gather.3} parent=96 // pred_fallthru
          _
      $region97: #{_propagate_pool_gather.3} parent=5 // pred_fallthru
        _
    $region6: #{_propagate_pool_gather.3} parent=1 // loop_footer
      %s30 = sadd.s32 1, %s26
    $region7: #{_propagate_pool_gather.3} parent=1 // loop_footer_branch
      %25 = sbr.rel target = $region3
    $region8: #{_propagate_pool_gather.3} parent=1 // loop_exit
      _

</llo_original>
